<compile_context>
chip_gen: v6e
topology: v6e:2x2x1
jax: 0.10.0
libtpu: 0.0.40
codegen_flags: <defaults>
</compile_context>

<pallas_src>
import jax
import jax.numpy as jnp
from jax.experimental import pallas as pl
from jax.experimental.pallas import tpu as pltpu

INPUT_DIM = 28 * 28   # 784
INTER_DIM = 256
LATENT_DIM = 2

STATS_MM = 128        # lane-padded width of the encoder-head matmul (VMEM only)
STATS_OUT = 8         # HBM width of the mu|logvar slab actually written back
TB_MAX = 512          # max batch-tile rows


def _round_up(x, m):
    return (x + m - 1) // m * m


def _choose_tb(batch):
    """Pick a batch tile: 8-aligned, <=TB_MAX, divides `batch` when possible,
    and leaves >=2 grid steps (megacore / pipelining) when batch > 16."""
    if batch <= 16:
        return _round_up(max(batch, 8), 8)
    upper = min(TB_MAX, max(8, (_round_up(batch, 8) // 2) // 8 * 8))
    best = None
    for tb in range(upper, 7, -8):
        pad = _round_up(batch, tb) - batch
        if pad == 0:
            return tb                       # exact split -> no jnp.pad pass
        if best is None or pad < best[0]:
            best = (pad, tb)
    return best[1]


def _vae_kernel(x_ref, eps_ref,
                w_e1_ref, b_e1_ref, w_e2_ref, b_e2_ref,
                w_d1_ref, b_d1_ref, w_d2_ref, b_d2_ref,
                recon_ref, stats_ref):
    # ---- encoder: Linear(784,256) + ReLU + Linear(256, 2*latent) ----
    x = x_ref[...].astype(jnp.bfloat16)                  # f32 HBM read, free cast
    h = jnp.dot(x, w_e1_ref[...],
                preferred_element_type=jnp.float32) + b_e1_ref[...]
    h = jnp.maximum(h, 0.0)                              # (TB, 256) f32

    stats = jnp.dot(h, w_e2_ref[...],
                    preferred_element_type=jnp.float32) + b_e2_ref[...]
    # stats: (TB, 128) with mu in lanes [0:2), logvar in [2:4), zeros elsewhere.
    stats_ref[...] = stats[:, :STATS_OUT]                # only 8 lanes hit HBM

    eps = eps_ref[...]                                   # (TB, 2) f32

    # ---- reparameterize: z = mu + eps * exp(logvar / 2)  (pure VPU/EUP) ----
    z0 = stats[:, 0:1] + eps[:, 0:1] * jnp.exp(0.5 * stats[:, 2:3])
    z1 = stats[:, 1:2] + eps[:, 1:2] * jnp.exp(0.5 * stats[:, 3:4])

    # ---- decoder layer 1: K=2 matmul as two broadcast FMAs (keeps MXU free) ----
    d = z0 * w_d1_ref[0:1, :] + z1 * w_d1_ref[1:2, :] + b_d1_ref[...]
    d = jnp.maximum(d, 0.0)                              # (TB, 256) f32

    # ---- decoder layer 2: Linear(256, 784) + Sigmoid ----
    logits = jnp.dot(d.astype(jnp.bfloat16), w_d2_ref[...],
                     preferred_element_type=jnp.float32) + b_d2_ref[...]
    # Sigmoid math in f32 (safe on v5e EUP); store in recon dtype (bf16 default).
    recon_ref[...] = jax.nn.sigmoid(logits).astype(recon_ref.dtype)


def vae_forward(x, eps, params, recon_dtype=jnp.bfloat16):
    """x: (B, C, H, W) float32, eps: (B, LATENT_DIM) float32."""
    (w_e1, b_e1, w_e2, b_e2, w_d1, b_d1, w_d2, b_d2) = params
    org_shape = x.shape
    B = org_shape[0]
    xf = x.reshape(B, -1).astype(jnp.float32)            # x.view(B, -1); stays f32
    assert xf.shape[1] == INPUT_DIM
    eps_f = eps.astype(jnp.float32)

    tb = _choose_tb(B)
    B_pad = _round_up(B, tb)
    if B_pad != B:                                       # ragged-batch fallback only
        xf = jnp.pad(xf, ((0, B_pad - B), (0, 0)))
        eps_f = jnp.pad(eps_f, ((0, B_pad - B), (0, 0)))

    # bf16 only for the two large matmul weights (f32 accumulation in-kernel).
    w_e1_b = w_e1.astype(jnp.bfloat16)
    w_d2_b = w_d2.astype(jnp.bfloat16)

    # Lane-pad the tiny encoder head so its matmul is a clean 128-lane MXU op;
    # only the first STATS_OUT lanes are ever written back to HBM.
    w_e2_p = jnp.pad(w_e2, ((0, 0), (0, STATS_MM - 2 * LATENT_DIM)))
    b_e2_p = jnp.pad(b_e2, ((0, 0), (0, STATS_MM - 2 * LATENT_DIM)))

    grid = (B_pad // tb,)
    batch_map = lambda i: (i, 0)
    weight_map = lambda i: (0, 0)     # constant -> fetched once, VMEM-resident

    in_specs = [
        pl.BlockSpec((tb, INPUT_DIM), batch_map),             # x (f32)
        pl.BlockSpec((tb, LATENT_DIM), batch_map),            # eps
        pl.BlockSpec((INPUT_DIM, INTER_DIM), weight_map),     # w_e1 (bf16)
        pl.BlockSpec((1, INTER_DIM), weight_map),             # b_e1
        pl.BlockSpec((INTER_DIM, STATS_MM), weight_map),      # w_e2 (lane-padded)
        pl.BlockSpec((1, STATS_MM), weight_map),              # b_e2 (lane-padded)
        pl.BlockSpec((LATENT_DIM, INTER_DIM), weight_map),    # w_d1
        pl.BlockSpec((1, INTER_DIM), weight_map),             # b_d1
        pl.BlockSpec((INTER_DIM, INPUT_DIM), weight_map),     # w_d2 (bf16)
        pl.BlockSpec((1, INPUT_DIM), weight_map),             # b_d2
    ]
    out_specs = (
        pl.BlockSpec((tb, INPUT_DIM), batch_map),             # recon (no pad)
        pl.BlockSpec((tb, STATS_OUT), batch_map),             # mu|logvar|0
    )
    out_shape = (
        jax.ShapeDtypeStruct((B_pad, INPUT_DIM), recon_dtype),
        jax.ShapeDtypeStruct((B_pad, STATS_OUT), jnp.float32),
    )

    flops = 2 * B_pad * (INPUT_DIM * INTER_DIM + INTER_DIM * STATS_MM
                         + 2 * INTER_DIM + INTER_DIM * INPUT_DIM)
    transcendentals = B_pad * (LATENT_DIM + 2 * INPUT_DIM)
    bytes_accessed = (
        xf.size * 4 + eps_f.size * 4
        + w_e1_b.size * 2 + w_e2_p.size * 4 + w_d1.size * 4 + w_d2_b.size * 2
        + (b_e1.size + b_e2_p.size + b_d1.size + b_d2.size) * 4
        + B_pad * INPUT_DIM * jnp.dtype(recon_dtype).itemsize
        + B_pad * STATS_OUT * 4)

    recon, stats = pl.pallas_call(
        _vae_kernel,
        grid=grid,
        in_specs=in_specs,
        out_specs=out_specs,
        out_shape=out_shape,
        compiler_params=pltpu.CompilerParams(
            dimension_semantics=("parallel",),          # megacore split on v7x
            vmem_limit_bytes=32 * 1024 * 1024),         # v5e scoped default is 16 MiB
        cost_estimate=pl.CostEstimate(
            flops=flops,
            transcendentals=transcendentals,
            bytes_accessed=bytes_accessed),
    )(xf, eps_f, w_e1_b, b_e1, w_e2_p, b_e2_p, w_d1, b_d1, w_d2_b, b_d2)

    if B_pad != B:                       # only pay the slice on ragged batches
        recon = recon[:B]
        stats = stats[:B]
    recon_x = recon.reshape(org_shape)   # .view(size=org_size) -- free reshape
    mu = stats[:, :LATENT_DIM]
    logvar = stats[:, LATENT_DIM:2 * LATENT_DIM]
    return recon_x, mu, logvar


def init_params(key):
    """Deterministic parameter init (shapes follow the PyTorch module)."""
    ks = jax.random.split(key, 8)
    scale = 0.02
    w_e1 = scale * jax.random.normal(ks[0], (INPUT_DIM, INTER_DIM), jnp.float32)
    b_e1 = scale * jax.random.normal(ks[1], (1, INTER_DIM), jnp.float32)
    w_e2 = scale * jax.random.normal(ks[2], (INTER_DIM, 2 * LATENT_DIM), jnp.float32)
    b_e2 = scale * jax.random.normal(ks[3], (1, 2 * LATENT_DIM), jnp.float32)
    w_d1 = scale * jax.random.normal(ks[4], (LATENT_DIM, INTER_DIM), jnp.float32)
    b_d1 = scale * jax.random.normal(ks[5], (1, INTER_DIM), jnp.float32)
    w_d2 = scale * jax.random.normal(ks[6], (INTER_DIM, INPUT_DIM), jnp.float32)
    b_d2 = scale * jax.random.normal(ks[7], (1, INPUT_DIM), jnp.float32)
    return (w_e1, b_e1, w_e2, b_e2, w_d1, b_d1, w_d2, b_d2)


def _reference_forward(x, eps, params):
    """Pure-JAX reference using the same bf16-matmul / f32-elsewhere recipe."""
    (w_e1, b_e1, w_e2, b_e2, w_d1, b_d1, w_d2, b_d2) = params
    B = x.shape[0]
    xf = x.reshape(B, -1).astype(jnp.float32)
    h = jnp.dot(xf.astype(jnp.bfloat16), w_e1.astype(jnp.bfloat16),
                preferred_element_type=jnp.float32) + b_e1
    h = jnp.maximum(h, 0.0)
    stats = jnp.dot(h, w_e2, preferred_element_type=jnp.float32) + b_e2
    mu, logvar = stats[:, :LATENT_DIM], stats[:, LATENT_DIM:]
    z = mu + eps * jnp.exp(logvar * 0.5)
    d = jnp.maximum(z @ w_d1 + b_d1, 0.0)
    logits = jnp.dot(d.astype(jnp.bfloat16), w_d2.astype(jnp.bfloat16),
                     preferred_element_type=jnp.float32) + b_d2
    recon = jax.nn.sigmoid(logits).reshape(x.shape)
    return recon, mu, logvar


if __name__ == "__main__":
    key = jax.random.PRNGKey(0)
    k_param, k_x, k_eps = jax.random.split(key, 3)
    params = init_params(k_param)

    # B=8 exercises the single-tile path; B=50 exercises the multi-tile grid
    # plus the ragged-batch (zero-pad) fallback, as requested by the review.
    for B in (8, 50):
        kx = jax.random.fold_in(k_x, B)
        ke = jax.random.fold_in(k_eps, B)
        x = jax.random.uniform(kx, (B, 1, 28, 28), jnp.float32)      # MNIST-like NCHW
        eps = jax.random.normal(ke, (B, LATENT_DIM), jnp.float32)    # randn_like(mu)

        recon_x, mu, logvar = jax.block_until_ready(vae_forward(x, eps, params))

        r_ref, mu_ref, lv_ref = _reference_forward(x, eps, params)
        assert recon_x.shape == x.shape
        assert mu.shape == (B, LATENT_DIM) and logvar.shape == (B, LATENT_DIM)
        # recon is stored in bf16 -> bf16-level tolerance for values in (0, 1).
        assert jnp.allclose(recon_x.astype(jnp.float32),
                            r_ref.astype(jnp.float32), atol=1e-2, rtol=0.0)
        assert jnp.allclose(mu, mu_ref, atol=2e-3, rtol=2e-3)
        assert jnp.allclose(logvar, lv_ref, atol=2e-3, rtol=2e-3)

    print("KERNEL_OK")
</pallas_src>

<mosaic_0001>
module attributes {stable_mosaic.version = 11 : i64} {
  func.func @_vae_kernel(%arg0: i32, %arg1: memref<8x784xf32, #tpu.memory_space<vmem>>, %arg2: memref<8x2xf32, #tpu.memory_space<vmem>>, %arg3: memref<784x256xbf16, #tpu.memory_space<vmem>>, %arg4: memref<1x256xf32, #tpu.memory_space<vmem>>, %arg5: memref<256x128xf32, #tpu.memory_space<vmem>>, %arg6: memref<1x128xf32, #tpu.memory_space<vmem>>, %arg7: memref<2x256xf32, #tpu.memory_space<vmem>>, %arg8: memref<1x256xf32, #tpu.memory_space<vmem>>, %arg9: memref<256x784xbf16, #tpu.memory_space<vmem>>, %arg10: memref<1x784xf32, #tpu.memory_space<vmem>>, %arg11: memref<8x784xbf16, #tpu.memory_space<vmem>>, %arg12: memref<8x8xf32, #tpu.memory_space<vmem>>) attributes {dimension_semantics = [#tpu.dimension_semantics<parallel>], iteration_bounds = array<i64: 1>, scalar_prefetch = 0 : i64, scratch_operands = 0 : i64, tpu.core_type = #tpu.core_type<tc>, window_params = [{transform_indices = @transform_0, window_bounds = array<i64: 8, 784>}, {transform_indices = @transform_1, window_bounds = array<i64: 8, 2>}, {pipeline_mode = #tpu.pipeline_mode<synchronous>, transform_indices = @transform_2, window_bounds = array<i64: 784, 256>}, {pipeline_mode = #tpu.pipeline_mode<synchronous>, transform_indices = @transform_3, window_bounds = array<i64: 1, 256>}, {pipeline_mode = #tpu.pipeline_mode<synchronous>, transform_indices = @transform_4, window_bounds = array<i64: 256, 128>}, {pipeline_mode = #tpu.pipeline_mode<synchronous>, transform_indices = @transform_5, window_bounds = array<i64: 1, 128>}, {pipeline_mode = #tpu.pipeline_mode<synchronous>, transform_indices = @transform_6, window_bounds = array<i64: 2, 256>}, {pipeline_mode = #tpu.pipeline_mode<synchronous>, transform_indices = @transform_7, window_bounds = array<i64: 1, 256>}, {pipeline_mode = #tpu.pipeline_mode<synchronous>, transform_indices = @transform_8, window_bounds = array<i64: 256, 784>}, {pipeline_mode = #tpu.pipeline_mode<synchronous>, transform_indices = @transform_9, window_bounds = array<i64: 1, 784>}, {transform_indices = @transform_10, window_bounds = array<i64: 8, 784>}, {transform_indices = @transform_11, window_bounds = array<i64: 8, 8>}]} {
    %c0 = arith.constant 0 : index
    %c0_0 = arith.constant 0 : index
    %0 = vector.load %arg1[%c0, %c0_0] : memref<8x784xf32, #tpu.memory_space<vmem>>, vector<8x784xf32>
    %1 = arith.truncf %0 : vector<8x784xf32> to vector<8x784xbf16>
    %c0_1 = arith.constant 0 : index
    %c0_2 = arith.constant 0 : index
    %2 = vector.load %arg3[%c0_1, %c0_2] : memref<784x256xbf16, #tpu.memory_space<vmem>>, vector<784x256xbf16>
    %cst = arith.constant dense<0.000000e+00> : vector<8x256xf32>
    %3 = tpu.matmul %1, %2, %cst {dimension_numbers = #tpu.dot_dimension_numbers<[1], [0], [0], [1], [0, 0, 1, 1], [], []>} : vector<8x784xbf16>, vector<784x256xbf16>, vector<8x256xf32> -> vector<8x256xf32>
    %c0_3 = arith.constant 0 : index
    %c0_4 = arith.constant 0 : index
    %4 = vector.load %arg4[%c0_3, %c0_4] : memref<1x256xf32, #tpu.memory_space<vmem>>, vector<1x256xf32>
    %5 = vector.broadcast %4 : vector<1x256xf32> to vector<8x256xf32>
    %6 = arith.addf %3, %5 : vector<8x256xf32>
    %cst_5 = arith.constant 0.000000e+00 : f32
    %7 = vector.broadcast %cst_5 : f32 to vector<8x256xf32>
    %8 = arith.maximumf %6, %7 : vector<8x256xf32>
    %c0_6 = arith.constant 0 : index
    %c0_7 = arith.constant 0 : index
    %9 = vector.load %arg5[%c0_6, %c0_7] : memref<256x128xf32, #tpu.memory_space<vmem>>, vector<256x128xf32>
    %cst_8 = arith.constant dense<0.000000e+00> : vector<8x128xf32>
    %10 = tpu.matmul %8, %9, %cst_8 {dimension_numbers = #tpu.dot_dimension_numbers<[1], [0], [0], [1], [0, 0, 1, 1], [], []>} : vector<8x256xf32>, vector<256x128xf32>, vector<8x128xf32> -> vector<8x128xf32>
    %c0_9 = arith.constant 0 : index
    %c0_10 = arith.constant 0 : index
    %11 = vector.load %arg6[%c0_9, %c0_10] : memref<1x128xf32, #tpu.memory_space<vmem>>, vector<1x128xf32>
    %12 = vector.broadcast %11 : vector<1x128xf32> to vector<8x128xf32>
    %13 = arith.addf %10, %12 : vector<8x128xf32>
    %14 = vector.extract_strided_slice %13 {offsets = [0, 0], sizes = [8, 8], strides = [1, 1]} : vector<8x128xf32> to vector<8x8xf32>
    %c0_11 = arith.constant 0 : index
    %c0_12 = arith.constant 0 : index
    %15 = vector.load %arg12[%c0_11, %c0_12] : memref<8x8xf32, #tpu.memory_space<vmem>>, vector<8x8xf32>
    tpu.vector_store %arg12[%c0_11, %c0_12], %14 {strides = array<i32>} : memref<8x8xf32, #tpu.memory_space<vmem>>, vector<8x8xf32>,
    %c0_13 = arith.constant 0 : index
    %c0_14 = arith.constant 0 : index
    %16 = vector.load %arg2[%c0_13, %c0_14] : memref<8x2xf32, #tpu.memory_space<vmem>>, vector<8x2xf32>
    %17 = vector.extract_strided_slice %13 {offsets = [0, 0], sizes = [8, 1], strides = [1, 1]} : vector<8x128xf32> to vector<8x1xf32>
    %18 = vector.extract_strided_slice %16 {offsets = [0, 0], sizes = [8, 1], strides = [1, 1]} : vector<8x2xf32> to vector<8x1xf32>
    %19 = vector.extract_strided_slice %13 {offsets = [0, 2], sizes = [8, 1], strides = [1, 1]} : vector<8x128xf32> to vector<8x1xf32>
    %cst_15 = arith.constant 5.000000e-01 : f32
    %20 = vector.broadcast %cst_15 : f32 to vector<8x1xf32>
    %21 = arith.mulf %20, %19 : vector<8x1xf32>
    %22 = math.exp %21 : vector<8x1xf32>
    %23 = arith.mulf %18, %22 : vector<8x1xf32>
    %24 = arith.addf %17, %23 : vector<8x1xf32>
    %25 = vector.extract_strided_slice %13 {offsets = [0, 1], sizes = [8, 1], strides = [1, 1]} : vector<8x128xf32> to vector<8x1xf32>
    %26 = vector.extract_strided_slice %16 {offsets = [0, 1], sizes = [8, 1], strides = [1, 1]} : vector<8x2xf32> to vector<8x1xf32>
    %27 = vector.extract_strided_slice %13 {offsets = [0, 3], sizes = [8, 1], strides = [1, 1]} : vector<8x128xf32> to vector<8x1xf32>
    %cst_16 = arith.constant 5.000000e-01 : f32
    %28 = vector.broadcast %cst_16 : f32 to vector<8x1xf32>
    %29 = arith.mulf %28, %27 : vector<8x1xf32>
    %30 = math.exp %29 : vector<8x1xf32>
    %31 = arith.mulf %26, %30 : vector<8x1xf32>
    %32 = arith.addf %25, %31 : vector<8x1xf32>
    %c0_17 = arith.constant 0 : index
    %c0_18 = arith.constant 0 : index
    %33 = vector.load %arg7[%c0_17, %c0_18] : memref<2x256xf32, #tpu.memory_space<vmem>>, vector<1x256xf32>
    %34 = vector.broadcast %24 : vector<8x1xf32> to vector<8x256xf32>
    %35 = vector.broadcast %33 : vector<1x256xf32> to vector<8x256xf32>
    %36 = arith.mulf %34, %35 : vector<8x256xf32>
    %c1 = arith.constant 1 : index
    %c0_19 = arith.constant 0 : index
    %37 = vector.load %arg7[%c1, %c0_19] : memref<2x256xf32, #tpu.memory_space<vmem>>, vector<1x256xf32>
    %38 = vector.broadcast %32 : vector<8x1xf32> to vector<8x256xf32>
    %39 = vector.broadcast %37 : vector<1x256xf32> to vector<8x256xf32>
    %40 = arith.mulf %38, %39 : vector<8x256xf32>
    %41 = arith.addf %36, %40 : vector<8x256xf32>
    %c0_20 = arith.constant 0 : index
    %c0_21 = arith.constant 0 : index
    %42 = vector.load %arg8[%c0_20, %c0_21] : memref<1x256xf32, #tpu.memory_space<vmem>>, vector<1x256xf32>
    %43 = vector.broadcast %42 : vector<1x256xf32> to vector<8x256xf32>
    %44 = arith.addf %41, %43 : vector<8x256xf32>
    %cst_22 = arith.constant 0.000000e+00 : f32
    %45 = vector.broadcast %cst_22 : f32 to vector<8x256xf32>
    %46 = arith.maximumf %44, %45 : vector<8x256xf32>
    %47 = arith.truncf %46 : vector<8x256xf32> to vector<8x256xbf16>
    %c0_23 = arith.constant 0 : index
    %c0_24 = arith.constant 0 : index
    %48 = vector.load %arg9[%c0_23, %c0_24] : memref<256x784xbf16, #tpu.memory_space<vmem>>, vector<256x784xbf16>
    %cst_25 = arith.constant dense<0.000000e+00> : vector<8x784xf32>
    %49 = tpu.matmul %47, %48, %cst_25 {dimension_numbers = #tpu.dot_dimension_numbers<[1], [0], [0], [1], [0, 0, 1, 1], [], []>} : vector<8x256xbf16>, vector<256x784xbf16>, vector<8x784xf32> -> vector<8x784xf32>
    %c0_26 = arith.constant 0 : index
    %c0_27 = arith.constant 0 : index
    %50 = vector.load %arg10[%c0_26, %c0_27] : memref<1x784xf32, #tpu.memory_space<vmem>>, vector<1x784xf32>
    %51 = vector.broadcast %50 : vector<1x784xf32> to vector<8x784xf32>
    %52 = arith.addf %49, %51 : vector<8x784xf32>
    %53 = arith.negf %52 : vector<8x784xf32>
    %54 = math.exp %53 : vector<8x784xf32>
    %cst_28 = arith.constant 1.000000e+00 : f32
    %55 = vector.broadcast %cst_28 : f32 to vector<8x784xf32>
    %56 = arith.addf %55, %54 : vector<8x784xf32>
    %57 = arith.divf %55, %56 : vector<8x784xf32>
    %58 = arith.truncf %57 : vector<8x784xf32> to vector<8x784xbf16>
    %c0_29 = arith.constant 0 : index
    %c0_30 = arith.constant 0 : index
    %59 = vector.load %arg11[%c0_29, %c0_30] : memref<8x784xbf16, #tpu.memory_space<vmem>>, vector<8x784xbf16>
    tpu.vector_store %arg11[%c0_29, %c0_30], %58 {strides = array<i32>} : memref<8x784xbf16, #tpu.memory_space<vmem>>, vector<8x784xbf16>,
    return
  }
  func.func @transform_0(%arg0: i32) -> (i32, i32) {
    %c0_i32 = arith.constant 0 : i32
    %c0_i32_0 = arith.constant 0 : i32
    return %arg0, %c0_i32 : i32, i32
  }
  func.func @transform_1(%arg0: i32) -> (i32, i32) {
    %c0_i32 = arith.constant 0 : i32
    %c0_i32_0 = arith.constant 0 : i32
    return %arg0, %c0_i32 : i32, i32
  }
  func.func @transform_2(%arg0: i32) -> (i32, i32) {
    %c0_i32 = arith.constant 0 : i32
    %c0_i32_0 = arith.constant 0 : i32
    %c0_i32_1 = arith.constant 0 : i32
    return %c0_i32, %c0_i32_0 : i32, i32
  }
  func.func @transform_3(%arg0: i32) -> (i32, i32) {
    %c0_i32 = arith.constant 0 : i32
    %c0_i32_0 = arith.constant 0 : i32
    %c0_i32_1 = arith.constant 0 : i32
    return %c0_i32, %c0_i32_0 : i32, i32
  }
  func.func @transform_4(%arg0: i32) -> (i32, i32) {
    %c0_i32 = arith.constant 0 : i32
    %c0_i32_0 = arith.constant 0 : i32
    %c0_i32_1 = arith.constant 0 : i32
    return %c0_i32, %c0_i32_0 : i32, i32
  }
  func.func @transform_5(%arg0: i32) -> (i32, i32) {
    %c0_i32 = arith.constant 0 : i32
    %c0_i32_0 = arith.constant 0 : i32
    %c0_i32_1 = arith.constant 0 : i32
    return %c0_i32, %c0_i32_0 : i32, i32
  }
  func.func @transform_6(%arg0: i32) -> (i32, i32) {
    %c0_i32 = arith.constant 0 : i32
    %c0_i32_0 = arith.constant 0 : i32
    %c0_i32_1 = arith.constant 0 : i32
    return %c0_i32, %c0_i32_0 : i32, i32
  }
  func.func @transform_7(%arg0: i32) -> (i32, i32) {
    %c0_i32 = arith.constant 0 : i32
    %c0_i32_0 = arith.constant 0 : i32
    %c0_i32_1 = arith.constant 0 : i32
    return %c0_i32, %c0_i32_0 : i32, i32
  }
  func.func @transform_8(%arg0: i32) -> (i32, i32) {
    %c0_i32 = arith.constant 0 : i32
    %c0_i32_0 = arith.constant 0 : i32
    %c0_i32_1 = arith.constant 0 : i32
    return %c0_i32, %c0_i32_0 : i32, i32
  }
  func.func @transform_9(%arg0: i32) -> (i32, i32) {
    %c0_i32 = arith.constant 0 : i32
    %c0_i32_0 = arith.constant 0 : i32
    %c0_i32_1 = arith.constant 0 : i32
    return %c0_i32, %c0_i32_0 : i32, i32
  }
  func.func @transform_10(%arg0: i32) -> (i32, i32) {
    %c0_i32 = arith.constant 0 : i32
    %c0_i32_0 = arith.constant 0 : i32
    return %arg0, %c0_i32 : i32, i32
  }
  func.func @transform_11(%arg0: i32) -> (i32, i32) {
    %c0_i32 = arith.constant 0 : i32
    %c0_i32_0 = arith.constant 0 : i32
    return %arg0, %c0_i32 : i32, i32
  }
}

</mosaic_0001>

<llo_original>
// kernel: tpu_custom_call.1
$region0: #{tpu_custom_call.1}
  #allocation0 [shape = 'u32[]', space=smem, size = 0x4, offset = 0x4, fixed_abs, tag = 'smem constant byte address 0x4 - core index']
  #allocation1 [shape = 'u32[144,128]{1,0:T(1,128)}', space=vmem, size = 0x12000, scoped, tag = 'internal scratch']
  %s0 = inlined_call_operand.vmem [shape: f32[8,784], index: 0, kind: input, shape index: {}]
  %s1 = inlined_call_operand.vmem [shape: f32[8,2], index: 1, kind: input, shape index: {}]
  %s2 = inlined_call_operand.vmem [shape: bf16[784,256], index: 2, kind: input, shape index: {}]
  %s3 = inlined_call_operand.vmem [shape: f32[1,256], index: 3, kind: input, shape index: {}]
  %s4 = inlined_call_operand.vmem [shape: f32[256,128], index: 4, kind: input, shape index: {}]
  %s5 = inlined_call_operand.vmem [shape: f32[1,128], index: 5, kind: input, shape index: {}]
  %s6 = inlined_call_operand.vmem [shape: f32[2,256], index: 6, kind: input, shape index: {}]
  %s7 = inlined_call_operand.vmem [shape: f32[1,256], index: 7, kind: input, shape index: {}]
  %s8 = inlined_call_operand.vmem [shape: bf16[256,784], index: 8, kind: input, shape index: {}]
  %s9 = inlined_call_operand.vmem [shape: f32[1,784], index: 9, kind: input, shape index: {}]
  %s10 = inlined_call_operand.hbm [shape: bf16[8,784], index: 10, kind: output, shape index: {0}]
  %s11 = inlined_call_operand.hbm [shape: f32[8,8], index: 11, kind: output, shape index: {1}]
  %12 = xla_tuple %s10, %s11
  %s13 = sld [smem:[#allocation0]]
  $region58: #{tpu_custom_call.1} parent=0
    _
  %s15 = ssub.s32 1, %s13
  %s16 = scalar_select 0, %s15, %s13
  $region1: #{tpu_custom_call.1} parent=0
    #allocation2 [shape = 'u8[14336]{0}', space=vmem, size = 0x3800, scoped, tag = 'output window, operand 0, single buffered']
    #allocation3 [shape = 's32[1]{0}', space=sflag, size = 0x4, scoped, tag = 'scoped memory for tpu_custom_call.1']
    #allocation4 [shape = 'u8[4096]{0}', space=vmem, size = 0x1000, scoped, tag = 'output window, operand 1, single buffered']
    #allocation5 [shape = 's32[1]{0}', space=sflag, size = 0x4, scoped, tag = 'scoped memory for tpu_custom_call.1']
    %17 = vsyncpa [#allocation3], 0
    %18 = vsyncpa [#allocation5], 0
    // Predicated region
    $region2: #{tpu_custom_call.1} parent=1 // pred_check
      _
    $region3: #{tpu_custom_call.1} parent=1 // pred_check_branch
      %20 = sbr.rel (0) target = $region5
    $region4: #{tpu_custom_call.1} parent=1 // pred_region
      _
    $region5: #{tpu_custom_call.1} parent=1 // pred_fallthru
      _
    // Predicated region
    $region6: #{tpu_custom_call.1} parent=1 // pred_check
      _
    $region7: #{tpu_custom_call.1} parent=1 // pred_check_branch
      %22 = sbr.rel (0) target = $region9
    $region8: #{tpu_custom_call.1} parent=1 // pred_region
      _
    $region9: #{tpu_custom_call.1} parent=1 // pred_fallthru
      _
    // Predicated region
    $region10: #{tpu_custom_call.1} parent=1 // pred_check
      _
    $region11: #{tpu_custom_call.1} parent=1 // pred_check_branch
      %24 = sbr.rel (0) target = $region13
    $region12: #{tpu_custom_call.1} parent=1 // pred_region
      _
    $region13: #{tpu_custom_call.1} parent=1 // pred_fallthru
      _
    // Predicated region
    $region14: #{tpu_custom_call.1} parent=1 // pred_check
      _
    $region15: #{tpu_custom_call.1} parent=1 // pred_check_branch
      %26 = sbr.rel (0) target = $region17
    $region16: #{tpu_custom_call.1} parent=1 // pred_region
      _
    $region17: #{tpu_custom_call.1} parent=1 // pred_fallthru
      _
    // Predicated region
    $region18: #{tpu_custom_call.1} parent=1 // pred_check
      _
    $region19: #{tpu_custom_call.1} parent=1 // pred_check_branch
      %28 = sbr.rel (0) target = $region21
    $region20: #{tpu_custom_call.1} parent=1 // pred_region
      _
    $region21: #{tpu_custom_call.1} parent=1 // pred_fallthru
      _
    // Predicated region
    $region22: #{tpu_custom_call.1} parent=1 // pred_check
      _
    $region23: #{tpu_custom_call.1} parent=1 // pred_check_branch
      %30 = sbr.rel (0) target = $region25
    $region24: #{tpu_custom_call.1} parent=1 // pred_region
      _
    $region25: #{tpu_custom_call.1} parent=1 // pred_fallthru
      _
    // Predicated region
    $region26: #{tpu_custom_call.1} parent=1 // pred_check
      _
    $region27: #{tpu_custom_call.1} parent=1 // pred_check_branch
      %32 = sbr.rel (0) target = $region29
    $region28: #{tpu_custom_call.1} parent=1 // pred_region
      _
    $region29: #{tpu_custom_call.1} parent=1 // pred_fallthru
      _
    // Predicated region
    $region30: #{tpu_custom_call.1} parent=1 // pred_check
      _
    $region31: #{tpu_custom_call.1} parent=1 // pred_check_branch
      %34 = sbr.rel (0) target = $region33
    $region32: #{tpu_custom_call.1} parent=1 // pred_region
      _
    $region33: #{tpu_custom_call.1} parent=1 // pred_fallthru
      _
    // Predicated region
    $region34: #{tpu_custom_call.1} parent=1 // pred_check
      _
    $region35: #{tpu_custom_call.1} parent=1 // pred_check_branch
      %36 = sbr.rel (0) target = $region37
    $region36: #{tpu_custom_call.1} parent=1 // pred_region
      _
    $region37: #{tpu_custom_call.1} parent=1 // pred_fallthru
      _
    // Predicated region
    $region38: #{tpu_custom_call.1} parent=1 // pred_check
      _
    $region39: #{tpu_custom_call.1} parent=1 // pred_check_branch
      %38 = sbr.rel (0) target = $region41
    $region40: #{tpu_custom_call.1} parent=1 // pred_region
      _
    $region41: #{tpu_custom_call.1} parent=1 // pred_fallthru
      _
    %v40 = vld [vmem:[%s0] sm:$0xff]
    %v41 = vld [vmem:[%s0 + $0x8] sm:$0xff]
    %v42 = vld [vmem:[%s0 + $0x10] sm:$0xff]
    %v43 = vld [vmem:[%s0 + $0x18] sm:$0xff]
    %v44 = vld [vmem:[%s0 + $0x20] sm:$0xff]
    %v45 = vld [vmem:[%s0 + $0x28] sm:$0xff]
    %v46 = vld [vmem:[%s0 + $0x30] sm:$0xff]
    %v47 = vpack.c.bf16 %v40, %v40
    %v48 = vpack.c.bf16 %v41, %v41
    %v49 = vpack.c.bf16 %v42, %v42
    %v50 = vpack.c.bf16 %v43, %v43
    %v51 = vpack.c.bf16 %v44, %v44
    %v52 = vpack.c.bf16 %v45, %v45
    %v53 = vpack.c.bf16 %v46, %v46
    %v54 = vld [vmem:[%s2] sm:$0xff]
    %v55 = vld [vmem:[%s2 + $0x8] sm:$0xff]
    %v56 = vld [vmem:[%s2 + $0x10] sm:$0xff]
    %v57 = vld [vmem:[%s2 + $0x18] sm:$0xff]
    %v58 = vld [vmem:[%s2 + $0x20] sm:$0xff]
    %v59 = vld [vmem:[%s2 + $0x28] sm:$0xff]
    %v60 = vld [vmem:[%s2 + $0x30] sm:$0xff]
    %v61 = vld [vmem:[%s2 + $0x38] sm:$0xff]
    %v62 = vld [vmem:[%s2 + $0x40] sm:$0xff]
    %v63 = vld [vmem:[%s2 + $0x48] sm:$0xff]
    %v64 = vld [vmem:[%s2 + $0x50] sm:$0xff]
    %v65 = vld [vmem:[%s2 + $0x58] sm:$0xff]
    %v66 = vld [vmem:[%s2 + $0x60] sm:$0xff]
    %v67 = vld [vmem:[%s2 + $0x68] sm:$0xff]
    %v68 = vld [vmem:[%s2 + $0x70] sm:$0xff]
    %v69 = vld [vmem:[%s2 + $0x78] sm:$0xff]
    %v70 = vld [vmem:[%s2 + $0x80] sm:$0xff]
    %v71 = vld [vmem:[%s2 + $0x88] sm:$0xff]
    %v72 = vld [vmem:[%s2 + $0x90] sm:$0xff]
    %v73 = vld [vmem:[%s2 + $0x98] sm:$0xff]
    %v74 = vld [vmem:[%s2 + $0xa0] sm:$0xff]
    %v75 = vld [vmem:[%s2 + $0xa8] sm:$0xff]
    %v76 = vld [vmem:[%s2 + $0xb0] sm:$0xff]
    %v77 = vld [vmem:[%s2 + $0xb8] sm:$0xff]
    %v78 = vld [vmem:[%s2 + $0xc0] sm:$0xff]
    %v79 = vld [vmem:[%s2 + $0xc8] sm:$0xff]
    %v80 = vld [vmem:[%s2 + $0xd0] sm:$0xff]
    %v81 = vld [vmem:[%s2 + $0xd8] sm:$0xff]
    %v82 = vld [vmem:[%s2 + $0xe0] sm:$0xff]
    %v83 = vld [vmem:[%s2 + $0xe8] sm:$0xff]
    %v84 = vld [vmem:[%s2 + $0xf0] sm:$0xff]
    %v85 = vld [vmem:[%s2 + $0xf8] sm:$0xff]
    %v86 = vld [vmem:[%s2 + $0x100] sm:$0xff]
    %v87 = vld [vmem:[%s2 + $0x108] sm:$0xff]
    %v88 = vld [vmem:[%s2 + $0x110] sm:$0xff]
    %v89 = vld [vmem:[%s2 + $0x118] sm:$0xff]
    %v90 = vld [vmem:[%s2 + $0x120] sm:$0xff]
    %v91 = vld [vmem:[%s2 + $0x128] sm:$0xff]
    %v92 = vld [vmem:[%s2 + $0x130] sm:$0xff]
    %v93 = vld [vmem:[%s2 + $0x138] sm:$0xff]
    %v94 = vld [vmem:[%s2 + $0x140] sm:$0xff]
    %v95 = vld [vmem:[%s2 + $0x148] sm:$0xff]
    %v96 = vld [vmem:[%s2 + $0x150] sm:$0xff]
    %v97 = vld [vmem:[%s2 + $0x158] sm:$0xff]
    %v98 = vld [vmem:[%s2 + $0x160] sm:$0xff]
    %v99 = vld [vmem:[%s2 + $0x168] sm:$0xff]
    %v100 = vld [vmem:[%s2 + $0x170] sm:$0xff]
    %v101 = vld [vmem:[%s2 + $0x178] sm:$0xff]
    %v102 = vld [vmem:[%s2 + $0x180] sm:$0xff]
    %v103 = vld [vmem:[%s2 + $0x188] sm:$0xff]
    %v104 = vld [vmem:[%s2 + $0x190] sm:$0xff]
    %v105 = vld [vmem:[%s2 + $0x198] sm:$0xff]
    %v106 = vld [vmem:[%s2 + $0x1a0] sm:$0xff]
    %v107 = vld [vmem:[%s2 + $0x1a8] sm:$0xff]
    %v108 = vld [vmem:[%s2 + $0x1b0] sm:$0xff]
    %v109 = vld [vmem:[%s2 + $0x1b8] sm:$0xff]
    %v110 = vld [vmem:[%s2 + $0x1c0] sm:$0xff]
    %v111 = vld [vmem:[%s2 + $0x1c8] sm:$0xff]
    %v112 = vld [vmem:[%s2 + $0x1d0] sm:$0xff]
    %v113 = vld [vmem:[%s2 + $0x1d8] sm:$0xff]
    %v114 = vld [vmem:[%s2 + $0x1e0] sm:$0xff]
    %v115 = vld [vmem:[%s2 + $0x1e8] sm:$0xff]
    %v116 = vld [vmem:[%s2 + $0x1f0] sm:$0xff]
    %v117 = vld [vmem:[%s2 + $0x1f8] sm:$0xff]
    %v118 = vld [vmem:[%s2 + $0x200] sm:$0xff]
    %v119 = vld [vmem:[%s2 + $0x208] sm:$0xff]
    %v120 = vld [vmem:[%s2 + $0x210] sm:$0xff]
    %v121 = vld [vmem:[%s2 + $0x218] sm:$0xff]
    %v122 = vld [vmem:[%s2 + $0x220] sm:$0xff]
    %v123 = vld [vmem:[%s2 + $0x228] sm:$0xff]
    %v124 = vld [vmem:[%s2 + $0x230] sm:$0xff]
    %v125 = vld [vmem:[%s2 + $0x238] sm:$0xff]
    %v126 = vld [vmem:[%s2 + $0x240] sm:$0xff]
    %v127 = vld [vmem:[%s2 + $0x248] sm:$0xff]
    %v128 = vld [vmem:[%s2 + $0x250] sm:$0xff]
    %v129 = vld [vmem:[%s2 + $0x258] sm:$0xff]
    %v130 = vld [vmem:[%s2 + $0x260] sm:$0xff]
    %v131 = vld [vmem:[%s2 + $0x268] sm:$0xff]
    %v132 = vld [vmem:[%s2 + $0x270] sm:$0xff]
    %v133 = vld [vmem:[%s2 + $0x278] sm:$0xff]
    %v134 = vld [vmem:[%s2 + $0x280] sm:$0xff]
    %v135 = vld [vmem:[%s2 + $0x288] sm:$0xff]
    %v136 = vld [vmem:[%s2 + $0x290] sm:$0xff]
    %v137 = vld [vmem:[%s2 + $0x298] sm:$0xff]
    %v138 = vld [vmem:[%s2 + $0x2a0] sm:$0xff]
    %v139 = vld [vmem:[%s2 + $0x2a8] sm:$0xff]
    %v140 = vld [vmem:[%s2 + $0x2b0] sm:$0xff]
    %v141 = vld [vmem:[%s2 + $0x2b8] sm:$0xff]
    %v142 = vld [vmem:[%s2 + $0x2c0] sm:$0xff]
    %v143 = vld [vmem:[%s2 + $0x2c8] sm:$0xff]
    %v144 = vld [vmem:[%s2 + $0x2d0] sm:$0xff]
    %v145 = vld [vmem:[%s2 + $0x2d8] sm:$0xff]
    %v146 = vld [vmem:[%s2 + $0x2e0] sm:$0xff]
    %v147 = vld [vmem:[%s2 + $0x2e8] sm:$0xff]
    %v148 = vld [vmem:[%s2 + $0x2f0] sm:$0xff]
    %v149 = vld [vmem:[%s2 + $0x2f8] sm:$0xff]
    %v150 = vld [vmem:[%s2 + $0x300] sm:$0xff]
    %v151 = vld [vmem:[%s2 + $0x308] sm:$0xff]
    %v152 = vld [vmem:[%s3] sm:$0x3]
    %v154 = vlaneseq
    %v155 = vshrl.u32 %v154, 7
    %v156 = vsub.s32 0, %v155
    %v157 = vrot.slane %v152, %v156
    %v158 = vlaneseq
    %v159 = vshrl.u32 %v158, 7
    %v160 = vsub.s32 1, %v159
    %v161 = vrot.slane %v152, %v160
    %v262 = vunpack.c.l.b16 %v54
    %v263 = vunpack.c.h.b16 %v54
    %v264 = vunpack.c.l.b16 %v55
    %v265 = vunpack.c.h.b16 %v55
    %v266 = vunpack.c.l.b16 %v56
    %v267 = vunpack.c.h.b16 %v56
    %v268 = vunpack.c.l.b16 %v57
    %v269 = vunpack.c.h.b16 %v57
    %v270 = vunpack.c.l.b16 %v58
    %v271 = vunpack.c.h.b16 %v58
    %v272 = vunpack.c.l.b16 %v59
    %v273 = vunpack.c.h.b16 %v59
    %v274 = vunpack.c.l.b16 %v60
    %v275 = vunpack.c.h.b16 %v60
    %v276 = vunpack.c.l.b16 %v61
    %v277 = vunpack.c.h.b16 %v61
    %v278 = vunpack.c.l.b16 %v62
    %v279 = vunpack.c.h.b16 %v62
    %v280 = vunpack.c.l.b16 %v63
    %v281 = vunpack.c.h.b16 %v63
    %v282 = vunpack.c.l.b16 %v64
    %v283 = vunpack.c.h.b16 %v64
    %v284 = vunpack.c.l.b16 %v65
    %v285 = vunpack.c.h.b16 %v65
    %v286 = vunpack.c.l.b16 %v66
    %v287 = vunpack.c.h.b16 %v66
    %v288 = vunpack.c.l.b16 %v67
    %v289 = vunpack.c.h.b16 %v67
    %v290 = vunpack.c.l.b16 %v68
    %v291 = vunpack.c.h.b16 %v68
    %v292 = vunpack.c.l.b16 %v69
    %v293 = vunpack.c.h.b16 %v69
    %v294 = vunpack.c.l.b16 %v70
    %v295 = vunpack.c.h.b16 %v70
    %v296 = vunpack.c.l.b16 %v71
    %v297 = vunpack.c.h.b16 %v71
    %v298 = vunpack.c.l.b16 %v72
    %v299 = vunpack.c.h.b16 %v72
    %v300 = vunpack.c.l.b16 %v73
    %v301 = vunpack.c.h.b16 %v73
    %v302 = vunpack.c.l.b16 %v74
    %v303 = vunpack.c.h.b16 %v74
    %v304 = vunpack.c.l.b16 %v75
    %v305 = vunpack.c.h.b16 %v75
    %v306 = vunpack.c.l.b16 %v76
    %v307 = vunpack.c.h.b16 %v76
    %v308 = vunpack.c.l.b16 %v77
    %v309 = vunpack.c.h.b16 %v77
    %v310 = vunpack.c.l.b16 %v78
    %v311 = vunpack.c.h.b16 %v78
    %v312 = vunpack.c.l.b16 %v79
    %v313 = vunpack.c.h.b16 %v79
    %v314 = vunpack.c.l.b16 %v80
    %v315 = vunpack.c.h.b16 %v80
    %v316 = vunpack.c.l.b16 %v81
    %v317 = vunpack.c.h.b16 %v81
    %v318 = vunpack.c.l.b16 %v82
    %v319 = vunpack.c.h.b16 %v82
    %v320 = vunpack.c.l.b16 %v83
    %v321 = vunpack.c.h.b16 %v83
    %v322 = vunpack.c.l.b16 %v84
    %v323 = vunpack.c.h.b16 %v84
    %v324 = vunpack.c.l.b16 %v85
    %v325 = vunpack.c.h.b16 %v85
    %v326 = vunpack.c.l.b16 %v86
    %v327 = vunpack.c.h.b16 %v86
    %v328 = vunpack.c.l.b16 %v87
    %v329 = vunpack.c.h.b16 %v87
    %v330 = vunpack.c.l.b16 %v88
    %v331 = vunpack.c.h.b16 %v88
    %v332 = vunpack.c.l.b16 %v89
    %v333 = vunpack.c.h.b16 %v89
    %v334 = vunpack.c.l.b16 %v90
    %v335 = vunpack.c.h.b16 %v90
    %v336 = vunpack.c.l.b16 %v91
    %v337 = vunpack.c.h.b16 %v91
    %v338 = vunpack.c.l.b16 %v92
    %v339 = vunpack.c.h.b16 %v92
    %v340 = vunpack.c.l.b16 %v93
    %v341 = vunpack.c.h.b16 %v93
    %v342 = vunpack.c.l.b16 %v94
    %v343 = vunpack.c.h.b16 %v94
    %v344 = vunpack.c.l.b16 %v95
    %v345 = vunpack.c.h.b16 %v95
    %v346 = vunpack.c.l.b16 %v96
    %v347 = vunpack.c.h.b16 %v96
    %v348 = vunpack.c.l.b16 %v97
    %v349 = vunpack.c.h.b16 %v97
    %v350 = vunpack.c.l.b16 %v98
    %v351 = vunpack.c.h.b16 %v98
    %v352 = vunpack.c.l.b16 %v99
    %v353 = vunpack.c.h.b16 %v99
    %v354 = vunpack.c.l.b16 %v100
    %v355 = vunpack.c.h.b16 %v100
    %v356 = vunpack.c.l.b16 %v101
    %v357 = vunpack.c.h.b16 %v101
    %v358 = vunpack.c.l.b16 %v102
    %v359 = vunpack.c.h.b16 %v102
    %v360 = vunpack.c.l.b16 %v103
    %v361 = vunpack.c.h.b16 %v103
    %v362 = vunpack.c.l.b16 %v104
    %v363 = vunpack.c.h.b16 %v104
    %v364 = vunpack.c.l.b16 %v105
    %v365 = vunpack.c.h.b16 %v105
    %v366 = vunpack.c.l.b16 %v106
    %v367 = vunpack.c.h.b16 %v106
    %v368 = vunpack.c.l.b16 %v107
    %v369 = vunpack.c.h.b16 %v107
    %v370 = vunpack.c.l.b16 %v108
    %v371 = vunpack.c.h.b16 %v108
    %v372 = vunpack.c.l.b16 %v109
    %v373 = vunpack.c.h.b16 %v109
    %v374 = vunpack.c.l.b16 %v110
    %v375 = vunpack.c.h.b16 %v110
    %v376 = vunpack.c.l.b16 %v111
    %v377 = vunpack.c.h.b16 %v111
    %v378 = vunpack.c.l.b16 %v112
    %v379 = vunpack.c.h.b16 %v112
    %v380 = vunpack.c.l.b16 %v113
    %v381 = vunpack.c.h.b16 %v113
    %v382 = vunpack.c.l.b16 %v114
    %v383 = vunpack.c.h.b16 %v114
    %v384 = vunpack.c.l.b16 %v115
    %v385 = vunpack.c.h.b16 %v115
    %v386 = vunpack.c.l.b16 %v116
    %v387 = vunpack.c.h.b16 %v116
    %v388 = vunpack.c.l.b16 %v117
    %v389 = vunpack.c.h.b16 %v117
    %v390 = vunpack.c.l.b16 %v118
    %v391 = vunpack.c.h.b16 %v118
    %v392 = vunpack.c.l.b16 %v119
    %v393 = vunpack.c.h.b16 %v119
    %v394 = vunpack.c.l.b16 %v120
    %v395 = vunpack.c.h.b16 %v120
    %v396 = vunpack.c.l.b16 %v121
    %v397 = vunpack.c.h.b16 %v121
    %v398 = vunpack.c.l.b16 %v122
    %v399 = vunpack.c.h.b16 %v122
    %v400 = vunpack.c.l.b16 %v123
    %v401 = vunpack.c.h.b16 %v123
    %v402 = vunpack.c.l.b16 %v124
    %v403 = vunpack.c.h.b16 %v124
    %v404 = vunpack.c.l.b16 %v125
    %v405 = vunpack.c.h.b16 %v125
    %v406 = vunpack.c.l.b16 %v126
    %v407 = vunpack.c.h.b16 %v126
    %v408 = vunpack.c.l.b16 %v127
    %v409 = vunpack.c.h.b16 %v127
    %v410 = vunpack.c.l.b16 %v128
    %v411 = vunpack.c.h.b16 %v128
    %v412 = vunpack.c.l.b16 %v129
    %v413 = vunpack.c.h.b16 %v129
    %v414 = vunpack.c.l.b16 %v130
    %v415 = vunpack.c.h.b16 %v130
    %v416 = vunpack.c.l.b16 %v131
    %v417 = vunpack.c.h.b16 %v131
    %v418 = vunpack.c.l.b16 %v132
    %v419 = vunpack.c.h.b16 %v132
    %v420 = vunpack.c.l.b16 %v133
    %v421 = vunpack.c.h.b16 %v133
    %v422 = vunpack.c.l.b16 %v134
    %v423 = vunpack.c.h.b16 %v134
    %v424 = vunpack.c.l.b16 %v135
    %v425 = vunpack.c.h.b16 %v135
    %v426 = vunpack.c.l.b16 %v136
    %v427 = vunpack.c.h.b16 %v136
    %v428 = vunpack.c.l.b16 %v137
    %v429 = vunpack.c.h.b16 %v137
    %v430 = vunpack.c.l.b16 %v138
    %v431 = vunpack.c.h.b16 %v138
    %v432 = vunpack.c.l.b16 %v139
    %v433 = vunpack.c.h.b16 %v139
    %v434 = vunpack.c.l.b16 %v140
    %v435 = vunpack.c.h.b16 %v140
    %v436 = vunpack.c.l.b16 %v141
    %v437 = vunpack.c.h.b16 %v141
    %v438 = vunpack.c.l.b16 %v142
    %v439 = vunpack.c.h.b16 %v142
    %v440 = vunpack.c.l.b16 %v143
    %v441 = vunpack.c.h.b16 %v143
    %v442 = vunpack.c.l.b16 %v144
    %v443 = vunpack.c.h.b16 %v144
    %v444 = vunpack.c.l.b16 %v145
    %v445 = vunpack.c.h.b16 %v145
    %v446 = vunpack.c.l.b16 %v146
    %v447 = vunpack.c.h.b16 %v146
    %v448 = vunpack.c.l.b16 %v147
    %v449 = vunpack.c.h.b16 %v147
    %v450 = vunpack.c.l.b16 %v148
    %v451 = vunpack.c.h.b16 %v148
    %v452 = vunpack.c.l.b16 %v149
    %v453 = vunpack.c.h.b16 %v149
    %v454 = vunpack.c.l.b16 %v150
    %v455 = vunpack.c.h.b16 %v150
    %v456 = vunpack.c.l.b16 %v151
    %v457 = vunpack.c.h.b16 %v151
    %v458 = vpack.c.b16 %v264, %v262
    %v459 = vpack.c.b16 %v265, %v263
    %v460 = vpack.c.b16 %v268, %v266
    %v461 = vpack.c.b16 %v269, %v267
    %v462 = vpack.c.b16 %v272, %v270
    %v463 = vpack.c.b16 %v273, %v271
    %v464 = vpack.c.b16 %v276, %v274
    %v465 = vpack.c.b16 %v277, %v275
    %v466 = vpack.c.b16 %v280, %v278
    %v467 = vpack.c.b16 %v281, %v279
    %v468 = vpack.c.b16 %v284, %v282
    %v469 = vpack.c.b16 %v285, %v283
    %v470 = vpack.c.b16 %v288, %v286
    %v471 = vpack.c.b16 %v289, %v287
    %v472 = vpack.c.b16 %v292, %v290
    %v473 = vpack.c.b16 %v293, %v291
    %v474 = vpack.c.b16 %v296, %v294
    %v475 = vpack.c.b16 %v297, %v295
    %v476 = vpack.c.b16 %v300, %v298
    %v477 = vpack.c.b16 %v301, %v299
    %v478 = vpack.c.b16 %v304, %v302
    %v479 = vpack.c.b16 %v305, %v303
    %v480 = vpack.c.b16 %v308, %v306
    %v481 = vpack.c.b16 %v309, %v307
    %v482 = vpack.c.b16 %v312, %v310
    %v483 = vpack.c.b16 %v313, %v311
    %v484 = vpack.c.b16 %v316, %v314
    %v485 = vpack.c.b16 %v317, %v315
    %v486 = vpack.c.b16 %v320, %v318
    %v487 = vpack.c.b16 %v321, %v319
    %v488 = vpack.c.b16 %v324, %v322
    %v489 = vpack.c.b16 %v325, %v323
    %v490 = vpack.c.b16 %v328, %v326
    %v491 = vpack.c.b16 %v329, %v327
    %v492 = vpack.c.b16 %v332, %v330
    %v493 = vpack.c.b16 %v333, %v331
    %v494 = vpack.c.b16 %v336, %v334
    %v495 = vpack.c.b16 %v337, %v335
    %v496 = vpack.c.b16 %v340, %v338
    %v497 = vpack.c.b16 %v341, %v339
    %v498 = vpack.c.b16 %v344, %v342
    %v499 = vpack.c.b16 %v345, %v343
    %v500 = vpack.c.b16 %v348, %v346
    %v501 = vpack.c.b16 %v349, %v347
    %v502 = vpack.c.b16 %v352, %v350
    %v503 = vpack.c.b16 %v353, %v351
    %v504 = vpack.c.b16 %v356, %v354
    %v505 = vpack.c.b16 %v357, %v355
    %v506 = vpack.c.b16 %v360, %v358
    %v507 = vpack.c.b16 %v361, %v359
    %v508 = vpack.c.b16 %v364, %v362
    %v509 = vpack.c.b16 %v365, %v363
    %v510 = vpack.c.b16 %v368, %v366
    %v511 = vpack.c.b16 %v369, %v367
    %v512 = vpack.c.b16 %v372, %v370
    %v513 = vpack.c.b16 %v373, %v371
    %v514 = vpack.c.b16 %v376, %v374
    %v515 = vpack.c.b16 %v377, %v375
    %v516 = vpack.c.b16 %v380, %v378
    %v517 = vpack.c.b16 %v381, %v379
    %v518 = vpack.c.b16 %v384, %v382
    %v519 = vpack.c.b16 %v385, %v383
    %v520 = vpack.c.b16 %v388, %v386
    %v521 = vpack.c.b16 %v389, %v387
    %v522 = vpack.c.b16 %v392, %v390
    %v523 = vpack.c.b16 %v393, %v391
    %v524 = vpack.c.b16 %v396, %v394
    %v525 = vpack.c.b16 %v397, %v395
    %v526 = vpack.c.b16 %v400, %v398
    %v527 = vpack.c.b16 %v401, %v399
    %v528 = vpack.c.b16 %v404, %v402
    %v529 = vpack.c.b16 %v405, %v403
    %v530 = vpack.c.b16 %v408, %v406
    %v531 = vpack.c.b16 %v409, %v407
    %v532 = vpack.c.b16 %v412, %v410
    %v533 = vpack.c.b16 %v413, %v411
    %v534 = vpack.c.b16 %v416, %v414
    %v535 = vpack.c.b16 %v417, %v415
    %v536 = vpack.c.b16 %v420, %v418
    %v537 = vpack.c.b16 %v421, %v419
    %v538 = vpack.c.b16 %v424, %v422
    %v539 = vpack.c.b16 %v425, %v423
    %v540 = vpack.c.b16 %v428, %v426
    %v541 = vpack.c.b16 %v429, %v427
    %v542 = vpack.c.b16 %v432, %v430
    %v543 = vpack.c.b16 %v433, %v431
    %v544 = vpack.c.b16 %v436, %v434
    %v545 = vpack.c.b16 %v437, %v435
    %v546 = vpack.c.b16 %v440, %v438
    %v547 = vpack.c.b16 %v441, %v439
    %v548 = vpack.c.b16 %v444, %v442
    %v549 = vpack.c.b16 %v445, %v443
    %v550 = vpack.c.b16 %v448, %v446
    %v551 = vpack.c.b16 %v449, %v447
    %v552 = vpack.c.b16 %v452, %v450
    %v553 = vpack.c.b16 %v453, %v451
    %v554 = vpack.c.b16 %v456, %v454
    %v555 = vpack.c.b16 %v457, %v455
    %vm654 = vcmask 130048
    %v656 = vsel %vm654, %v53, 0
    %658 = vmatprep.subr.bf16.mxu0 %v473
    %659 = vmatpush1.bf16.msra.mxu0 %v472
    %660 = vmatprep.subr.bf16.mxu0 %v471
    %661 = vmatpush1.bf16.msra.mxu0 %v470
    %662 = vmatprep.subr.bf16.mxu0 %v469
    %663 = vmatpush1.bf16.msra.mxu0 %v468
    %664 = vmatprep.subr.bf16.mxu0 %v467
    %665 = vmatpush1.bf16.msra.mxu0 %v466
    %666 = vmatprep.subr.bf16.mxu0 %v465
    %667 = vmatpush1.bf16.msra.mxu0 %v464
    %668 = vmatprep.subr.bf16.mxu0 %v463
    %669 = vmatpush1.bf16.msra.mxu0 %v462
    %670 = vmatprep.subr.bf16.mxu0 %v461
    %671 = vmatpush1.bf16.msra.mxu0 %v460
    %672 = vmatprep.subr.bf16.mxu0 %v459
    %673 = vmatpush1.bf16.msra.mxu0 %v458
    %674 = vmatprep.subr.bf16.mxu0 %v489
    %675 = vmatpush2.bf16.msra.mxu0 %v488
    %676 = vmatprep.subr.bf16.mxu0 %v487
    %677 = vmatpush2.bf16.msra.mxu0 %v486
    %678 = vmatprep.subr.bf16.mxu0 %v485
    %679 = vmatpush2.bf16.msra.mxu0 %v484
    %680 = vmatprep.subr.bf16.mxu0 %v483
    %681 = vmatpush2.bf16.msra.mxu0 %v482
    %682 = vmatprep.subr.bf16.mxu0 %v481
    %683 = vmatpush2.bf16.msra.mxu0 %v480
    %684 = vmatprep.subr.bf16.mxu0 %v479
    %685 = vmatpush2.bf16.msra.mxu0 %v478
    %686 = vmatprep.subr.bf16.mxu0 %v477
    %687 = vmatpush2.bf16.msra.mxu0 %v476
    %688 = vmatprep.subr.bf16.mxu0 %v475
    %689 = vmatpush2.bf16.msra.mxu0 %v474
    %690 = vmatprep.mubr.bf16.mxu0 %v48
    %691 = vmatmul.mubr.bf16.gmra.mxu0 %v47
    %v692 = vpop.f32.mrf.mxu0
    %v693 = vadd.f32 %v157, %v692
    %v694 = vpop.f32.mrf.mxu0
    %v695 = vadd.f32 %v161, %v694
    %v696 = vpop.f32.mrf.mxu0
    %v697 = vpop.f32.mrf.mxu0
    %698 = vdwg.mxu0
    %699 = vmatprep.subr.bf16.mxu0 %v505
    %700 = vmatpush1.bf16.msra.mxu0 %v504
    %701 = vmatprep.subr.bf16.mxu0 %v503
    %702 = vmatpush1.bf16.msra.mxu0 %v502
    %703 = vmatprep.subr.bf16.mxu0 %v501
    %704 = vmatpush1.bf16.msra.mxu0 %v500
    %705 = vmatprep.subr.bf16.mxu0 %v499
    %706 = vmatpush1.bf16.msra.mxu0 %v498
    %707 = vmatprep.subr.bf16.mxu0 %v497
    %708 = vmatpush1.bf16.msra.mxu0 %v496
    %709 = vmatprep.subr.bf16.mxu0 %v495
    %710 = vmatpush1.bf16.msra.mxu0 %v494
    %711 = vmatprep.subr.bf16.mxu0 %v493
    %712 = vmatpush1.bf16.msra.mxu0 %v492
    %713 = vmatprep.subr.bf16.mxu0 %v491
    %714 = vmatpush1.bf16.msra.mxu0 %v490
    %715 = vmatprep.subr.bf16.mxu0 %v521
    %716 = vmatpush2.bf16.msra.mxu0 %v520
    %717 = vmatprep.subr.bf16.mxu0 %v519
    %718 = vmatpush2.bf16.msra.mxu0 %v518
    %719 = vmatprep.subr.bf16.mxu0 %v517
    %720 = vmatpush2.bf16.msra.mxu0 %v516
    %721 = vmatprep.subr.bf16.mxu0 %v515
    %722 = vmatpush2.bf16.msra.mxu0 %v514
    %723 = vmatprep.subr.bf16.mxu0 %v513
    %724 = vmatpush2.bf16.msra.mxu0 %v512
    %725 = vmatprep.subr.bf16.mxu0 %v511
    %726 = vmatpush2.bf16.msra.mxu0 %v510
    %727 = vmatprep.subr.bf16.mxu0 %v509
    %728 = vmatpush2.bf16.msra.mxu0 %v508
    %729 = vmatprep.subr.bf16.mxu0 %v507
    %730 = vmatpush2.bf16.msra.mxu0 %v506
    %731 = vmatprep.mubr.bf16.mxu0 %v50
    %732 = vmatmul.mubr.bf16.gmra.mxu0 %v49
    %v733 = vpop.f32.mrf.mxu0
    %v734 = vadd.f32 %v693, %v733
    %v735 = vpop.f32.mrf.mxu0
    %v736 = vadd.f32 %v695, %v735
    %v737 = vpop.f32.mrf.mxu0
    %v738 = vpop.f32.mrf.mxu0
    %739 = vdwg.mxu0
    %740 = vmatprep.subr.bf16.mxu0 %v537
    %741 = vmatpush1.bf16.msra.mxu0 %v536
    %742 = vmatprep.subr.bf16.mxu0 %v535
    %743 = vmatpush1.bf16.msra.mxu0 %v534
    %744 = vmatprep.subr.bf16.mxu0 %v533
    %745 = vmatpush1.bf16.msra.mxu0 %v532
    %746 = vmatprep.subr.bf16.mxu0 %v531
    %747 = vmatpush1.bf16.msra.mxu0 %v530
    %748 = vmatprep.subr.bf16.mxu0 %v529
    %749 = vmatpush1.bf16.msra.mxu0 %v528
    %750 = vmatprep.subr.bf16.mxu0 %v527
    %751 = vmatpush1.bf16.msra.mxu0 %v526
    %752 = vmatprep.subr.bf16.mxu0 %v525
    %753 = vmatpush1.bf16.msra.mxu0 %v524
    %754 = vmatprep.subr.bf16.mxu0 %v523
    %755 = vmatpush1.bf16.msra.mxu0 %v522
    %756 = vmatprep.subr.bf16.mxu0 %v553
    %757 = vmatpush2.bf16.msra.mxu0 %v552
    %758 = vmatprep.subr.bf16.mxu0 %v551
    %759 = vmatpush2.bf16.msra.mxu0 %v550
    %760 = vmatprep.subr.bf16.mxu0 %v549
    %761 = vmatpush2.bf16.msra.mxu0 %v548
    %762 = vmatprep.subr.bf16.mxu0 %v547
    %763 = vmatpush2.bf16.msra.mxu0 %v546
    %764 = vmatprep.subr.bf16.mxu0 %v545
    %765 = vmatpush2.bf16.msra.mxu0 %v544
    %766 = vmatprep.subr.bf16.mxu0 %v543
    %767 = vmatpush2.bf16.msra.mxu0 %v542
    %768 = vmatprep.subr.bf16.mxu0 %v541
    %769 = vmatpush2.bf16.msra.mxu0 %v540
    %770 = vmatprep.subr.bf16.mxu0 %v539
    %771 = vmatpush2.bf16.msra.mxu0 %v538
    %772 = vmatprep.mubr.bf16.mxu0 %v52
    %773 = vmatmul.mubr.bf16.gmra.mxu0 %v51
    %v774 = vpop.f32.mrf.mxu0
    %v775 = vadd.f32 %v734, %v774
    %v776 = vpop.f32.mrf.mxu0
    %v777 = vadd.f32 %v736, %v776
    %v778 = vpop.f32.mrf.mxu0
    %v779 = vpop.f32.mrf.mxu0
    %780 = vdwg.mxu0
    %781 = vmatprep.subr.bf16.mxu0 0
    %782 = vmatpush1.bf16.msra.mxu0 0
    %783 = vmatprep.subr.bf16.mxu0 0
    %784 = vmatpush1.bf16.msra.mxu0 0
    %785 = vmatprep.subr.bf16.mxu0 0
    %786 = vmatpush1.bf16.msra.mxu0 0
    %787 = vmatprep.subr.bf16.mxu0 0
    %788 = vmatpush1.bf16.msra.mxu0 0
    %789 = vmatprep.subr.bf16.mxu0 0
    %790 = vmatpush1.bf16.msra.mxu0 0
    %791 = vmatprep.subr.bf16.mxu0 0
    %792 = vmatpush1.bf16.msra.mxu0 0
    %793 = vmatprep.subr.bf16.mxu0 0
    %794 = vmatpush1.bf16.msra.mxu0 0
    %795 = vmatprep.subr.bf16.mxu0 %v555
    %796 = vmatpush1.bf16.msra.mxu0 %v554
    %797 = vmatprep.subr.bf16.mxu0 0
    %798 = vmatpush2.bf16.msra.mxu0 0
    %799 = vmatprep.subr.bf16.mxu0 0
    %800 = vmatpush2.bf16.msra.mxu0 0
    %801 = vmatprep.subr.bf16.mxu0 0
    %802 = vmatpush2.bf16.msra.mxu0 0
    %803 = vmatprep.subr.bf16.mxu0 0
    %804 = vmatpush2.bf16.msra.mxu0 0
    %805 = vmatprep.subr.bf16.mxu0 0
    %806 = vmatpush2.bf16.msra.mxu0 0
    %807 = vmatprep.subr.bf16.mxu0 0
    %808 = vmatpush2.bf16.msra.mxu0 0
    %809 = vmatprep.subr.bf16.mxu0 0
    %810 = vmatpush2.bf16.msra.mxu0 0
    %811 = vmatprep.subr.bf16.mxu0 0
    %812 = vmatpush2.bf16.msra.mxu0 0
    %813 = vmatprep.mubr.bf16.mxu0 0
    %814 = vmatmul.mubr.bf16.gmra.mxu0 %v656
    %v815 = vpop.f32.mrf.mxu0
    %v816 = vadd.f32 %v775, %v815
    %v817 = vpop.f32.mrf.mxu0
    %v818 = vadd.f32 %v777, %v817
    %v819 = vpop.f32.mrf.mxu0
    %v820 = vpop.f32.mrf.mxu0
    %821 = vdwg.mxu0
    %v822 = vmax.f32 %v816, 0.0
    %v823 = vmax.f32 %v818, 0.0
    %v824 = vld [vmem:[%s4] sm:$0xff]
    %v825 = vld [vmem:[%s4 + $0x8] sm:$0xff]
    %v826 = vld [vmem:[%s4 + $0x10] sm:$0xff]
    %v827 = vld [vmem:[%s4 + $0x18] sm:$0xff]
    %v828 = vld [vmem:[%s4 + $0x20] sm:$0xff]
    %v829 = vld [vmem:[%s4 + $0x28] sm:$0xff]
    %v830 = vld [vmem:[%s4 + $0x30] sm:$0xff]
    %v831 = vld [vmem:[%s4 + $0x38] sm:$0xff]
    %v832 = vld [vmem:[%s4 + $0x40] sm:$0xff]
    %v833 = vld [vmem:[%s4 + $0x48] sm:$0xff]
    %v834 = vld [vmem:[%s4 + $0x50] sm:$0xff]
    %v835 = vld [vmem:[%s4 + $0x58] sm:$0xff]
    %v836 = vld [vmem:[%s4 + $0x60] sm:$0xff]
    %v837 = vld [vmem:[%s4 + $0x68] sm:$0xff]
    %v838 = vld [vmem:[%s4 + $0x70] sm:$0xff]
    %v839 = vld [vmem:[%s4 + $0x78] sm:$0xff]
    %v840 = vld [vmem:[%s4 + $0x80] sm:$0xff]
    %v841 = vld [vmem:[%s4 + $0x88] sm:$0xff]
    %v842 = vld [vmem:[%s4 + $0x90] sm:$0xff]
    %v843 = vld [vmem:[%s4 + $0x98] sm:$0xff]
    %v844 = vld [vmem:[%s4 + $0xa0] sm:$0xff]
    %v845 = vld [vmem:[%s4 + $0xa8] sm:$0xff]
    %v846 = vld [vmem:[%s4 + $0xb0] sm:$0xff]
    %v847 = vld [vmem:[%s4 + $0xb8] sm:$0xff]
    %v848 = vld [vmem:[%s4 + $0xc0] sm:$0xff]
    %v849 = vld [vmem:[%s4 + $0xc8] sm:$0xff]
    %v850 = vld [vmem:[%s4 + $0xd0] sm:$0xff]
    %v851 = vld [vmem:[%s4 + $0xd8] sm:$0xff]
    %v852 = vld [vmem:[%s4 + $0xe0] sm:$0xff]
    %v853 = vld [vmem:[%s4 + $0xe8] sm:$0xff]
    %v854 = vld [vmem:[%s4 + $0xf0] sm:$0xff]
    %v855 = vld [vmem:[%s4 + $0xf8] sm:$0xff]
    %v856 = vld [vmem:[%s5] sm:$0x1]
    %v858 = vlaneseq
    %v859 = vshrl.u32 %v858, 7
    %v860 = vsub.s32 0, %v859
    %v861 = vrot.slane %v856, %v860
    %863 = vmatprep.subr.mxu0 0.0
    %864 = vmatpush1.msra.mxu0 %v839
    %865 = vmatprep.subr.mxu0 0.0
    %866 = vmatpush1.msra.mxu0 %v838
    %867 = vmatprep.subr.mxu0 0.0
    %868 = vmatpush1.msra.mxu0 %v837
    %869 = vmatprep.subr.mxu0 0.0
    %870 = vmatpush1.msra.mxu0 %v836
    %871 = vmatprep.subr.mxu0 0.0
    %872 = vmatpush1.msra.mxu0 %v835
    %873 = vmatprep.subr.mxu0 0.0
    %874 = vmatpush1.msra.mxu0 %v834
    %875 = vmatprep.subr.mxu0 0.0
    %876 = vmatpush1.msra.mxu0 %v833
    %877 = vmatprep.subr.mxu0 0.0
    %878 = vmatpush1.msra.mxu0 %v832
    %879 = vmatprep.subr.mxu0 0.0
    %880 = vmatpush1.msra.mxu0 %v831
    %881 = vmatprep.subr.mxu0 0.0
    %882 = vmatpush1.msra.mxu0 %v830
    %883 = vmatprep.subr.mxu0 0.0
    %884 = vmatpush1.msra.mxu0 %v829
    %885 = vmatprep.subr.mxu0 0.0
    %886 = vmatpush1.msra.mxu0 %v828
    %887 = vmatprep.subr.mxu0 0.0
    %888 = vmatpush1.msra.mxu0 %v827
    %889 = vmatprep.subr.mxu0 0.0
    %890 = vmatpush1.msra.mxu0 %v826
    %891 = vmatprep.subr.mxu0 0.0
    %892 = vmatpush1.msra.mxu0 %v825
    %893 = vmatprep.subr.mxu0 0.0
    %894 = vmatpush1.msra.mxu0 %v824
    %895 = vmatprep.subr.mxu0 0.0
    %896 = vmatpush2.msra.mxu0 %v855
    %897 = vmatprep.subr.mxu0 0.0
    %898 = vmatpush2.msra.mxu0 %v854
    %899 = vmatprep.subr.mxu0 0.0
    %900 = vmatpush2.msra.mxu0 %v853
    %901 = vmatprep.subr.mxu0 0.0
    %902 = vmatpush2.msra.mxu0 %v852
    %903 = vmatprep.subr.mxu0 0.0
    %904 = vmatpush2.msra.mxu0 %v851
    %905 = vmatprep.subr.mxu0 0.0
    %906 = vmatpush2.msra.mxu0 %v850
    %907 = vmatprep.subr.mxu0 0.0
    %908 = vmatpush2.msra.mxu0 %v849
    %909 = vmatprep.subr.mxu0 0.0
    %910 = vmatpush2.msra.mxu0 %v848
    %911 = vmatprep.subr.mxu0 0.0
    %912 = vmatpush2.msra.mxu0 %v847
    %913 = vmatprep.subr.mxu0 0.0
    %914 = vmatpush2.msra.mxu0 %v846
    %915 = vmatprep.subr.mxu0 0.0
    %916 = vmatpush2.msra.mxu0 %v845
    %917 = vmatprep.subr.mxu0 0.0
    %918 = vmatpush2.msra.mxu0 %v844
    %919 = vmatprep.subr.mxu0 0.0
    %920 = vmatpush2.msra.mxu0 %v843
    %921 = vmatprep.subr.mxu0 0.0
    %922 = vmatpush2.msra.mxu0 %v842
    %923 = vmatprep.subr.mxu0 0.0
    %924 = vmatpush2.msra.mxu0 %v841
    %925 = vmatprep.subr.mxu0 0.0
    %926 = vmatpush2.msra.mxu0 %v840
    %927 = vmatprep.mubr.f32.mxu0 %v823
    %928 = vmatmul.mubr.f32.gmra.mxu0 %v822
    %v929 = vpop.f32.mrf.mxu0
    %v930 = vadd.f32 %v861, %v929
    %v931 = vpop.f32.mrf.mxu0
    %932 = vdwg.mxu0
    %vm933 = vcmask 64512
    %934 = vst.msk [vmem:[#allocation4] sm:$0xff] %vm933, %v930
    %v935 = vld [vmem:[%s1] sm:$0xff]
    %v936 = vmul.f32 %v930, 0.5
    %v937 = vmul.f32 %v936, 1.442695
    %v938 = vpow.pop %v937
    %940 = vrot.lane.b32.xlu0 %v938, 126
    %v941 = vpop.permute.xlu0 %940
    %v943 = vmul.f32 %v935, %v941
    %v944 = vadd.f32 %v930, %v943
    %v945 = vld [vmem:[%s6] ss:$2 sm:$0x3]
    %947 = vset.pattern.permute.xlu0 0
    %948 = vperm.xlu0 %947, %v944
    %v949 = vpop.permute.xlu0 %948
    %v952 = vlaneseq
    %v953 = vshrl.u32 %v952, 7
    %v954 = vsub.s32 0, %v953
    %v955 = vrot.slane %v945, %v954
    %v956 = vlaneseq
    %v957 = vshrl.u32 %v956, 7
    %v958 = vsub.s32 1, %v957
    %v959 = vrot.slane %v945, %v958
    %v962 = vmul.f32 %v949, %v955
    %v963 = vmul.f32 %v949, %v959
    %s964 = scalar_lea.vmem %s6, 1
    %v965 = vld [vmem:[%s964] ss:$2 sm:$0x3]
    %966 = vset.pattern.permute.xlu0 1
    %967 = vperm.xlu0 %966, %v944
    %v968 = vpop.permute.xlu0 %967
    %v971 = vlaneseq
    %v972 = vshrl.u32 %v971, 7
    %v973 = vsub.s32 0, %v972
    %v974 = vrot.slane %v965, %v973
    %v975 = vlaneseq
    %v976 = vshrl.u32 %v975, 7
    %v977 = vsub.s32 1, %v976
    %v978 = vrot.slane %v965, %v977
    %v981 = vmul.f32 %v968, %v974
    %v982 = vmul.f32 %v968, %v978
    %v983 = vadd.f32 %v962, %v981
    %v984 = vadd.f32 %v963, %v982
    %v985 = vld [vmem:[%s7] sm:$0x3]
    %v987 = vlaneseq
    %v988 = vshrl.u32 %v987, 7
    %v989 = vsub.s32 0, %v988
    %v990 = vrot.slane %v985, %v989
    %v991 = vlaneseq
    %v992 = vshrl.u32 %v991, 7
    %v993 = vsub.s32 1, %v992
    %v994 = vrot.slane %v985, %v993
    %v997 = vadd.f32 %v983, %v990
    %v998 = vadd.f32 %v984, %v994
    %v999 = vmax.f32 %v997, 0.0
    %v1000 = vmax.f32 %v998, 0.0
    %v1001 = vpack.c.bf16 %v999, %v999
    %v1002 = vpack.c.bf16 %v1000, %v1000
    %v1003 = vld [vmem:[%s8] sm:$0xff]
    %v1004 = vld [vmem:[%s8 + $0x8] sm:$0xff]
    %v1005 = vld [vmem:[%s8 + $0x10] sm:$0xff]
    %v1006 = vld [vmem:[%s8 + $0x18] sm:$0xf]
    %v1007 = vld [vmem:[%s8 + $0x1c] sm:$0xff]
    %v1008 = vld [vmem:[%s8 + $0x24] sm:$0xff]
    %v1009 = vld [vmem:[%s8 + $0x2c] sm:$0xff]
    %v1010 = vld [vmem:[%s8 + $0x34] sm:$0xf]
    %v1011 = vld [vmem:[%s8 + $0x38] sm:$0xff]
    %v1012 = vld [vmem:[%s8 + $0x40] sm:$0xff]
    %v1013 = vld [vmem:[%s8 + $0x48] sm:$0xff]
    %v1014 = vld [vmem:[%s8 + $0x50] sm:$0xf]
    %v1015 = vld [vmem:[%s8 + $0x54] sm:$0xff]
    %v1016 = vld [vmem:[%s8 + $0x5c] sm:$0xff]
    %v1017 = vld [vmem:[%s8 + $0x64] sm:$0xff]
    %v1018 = vld [vmem:[%s8 + $0x6c] sm:$0xf]
    %v1019 = vld [vmem:[%s8 + $0x70] sm:$0xff]
    %v1020 = vld [vmem:[%s8 + $0x78] sm:$0xff]
    %v1021 = vld [vmem:[%s8 + $0x80] sm:$0xff]
    %v1022 = vld [vmem:[%s8 + $0x88] sm:$0xf]
    %v1023 = vld [vmem:[%s8 + $0x8c] sm:$0xff]
    %v1024 = vld [vmem:[%s8 + $0x94] sm:$0xff]
    %v1025 = vld [vmem:[%s8 + $0x9c] sm:$0xff]
    %v1026 = vld [vmem:[%s8 + $0xa4] sm:$0xf]
    %v1027 = vld [vmem:[%s8 + $0xa8] sm:$0xff]
    %v1028 = vld [vmem:[%s8 + $0xb0] sm:$0xff]
    %v1029 = vld [vmem:[%s8 + $0xb8] sm:$0xff]
    %v1030 = vld [vmem:[%s8 + $0xc0] sm:$0xf]
    %v1031 = vld [vmem:[%s8 + $0xc4] sm:$0xff]
    %v1032 = vld [vmem:[%s8 + $0xcc] sm:$0xff]
    %v1033 = vld [vmem:[%s8 + $0xd4] sm:$0xff]
    %v1034 = vld [vmem:[%s8 + $0xdc] sm:$0xf]
    %v1035 = vld [vmem:[%s8 + $0xe0] sm:$0xff]
    %v1036 = vld [vmem:[%s8 + $0xe8] sm:$0xff]
    %v1037 = vld [vmem:[%s8 + $0xf0] sm:$0xff]
    %v1038 = vld [vmem:[%s8 + $0xf8] sm:$0xf]
    %v1039 = vld [vmem:[%s8 + $0xfc] sm:$0xff]
    %v1040 = vld [vmem:[%s8 + $0x104] sm:$0xff]
    %v1041 = vld [vmem:[%s8 + $0x10c] sm:$0xff]
    %v1042 = vld [vmem:[%s8 + $0x114] sm:$0xf]
    %v1043 = vld [vmem:[%s8 + $0x118] sm:$0xff]
    %v1044 = vld [vmem:[%s8 + $0x120] sm:$0xff]
    %v1045 = vld [vmem:[%s8 + $0x128] sm:$0xff]
    %v1046 = vld [vmem:[%s8 + $0x130] sm:$0xf]
    %v1047 = vld [vmem:[%s8 + $0x134] sm:$0xff]
    %v1048 = vld [vmem:[%s8 + $0x13c] sm:$0xff]
    %v1049 = vld [vmem:[%s8 + $0x144] sm:$0xff]
    %v1050 = vld [vmem:[%s8 + $0x14c] sm:$0xf]
    %v1051 = vld [vmem:[%s8 + $0x150] sm:$0xff]
    %v1052 = vld [vmem:[%s8 + $0x158] sm:$0xff]
    %v1053 = vld [vmem:[%s8 + $0x160] sm:$0xff]
    %v1054 = vld [vmem:[%s8 + $0x168] sm:$0xf]
    %v1055 = vld [vmem:[%s8 + $0x16c] sm:$0xff]
    %v1056 = vld [vmem:[%s8 + $0x174] sm:$0xff]
    %v1057 = vld [vmem:[%s8 + $0x17c] sm:$0xff]
    %v1058 = vld [vmem:[%s8 + $0x184] sm:$0xf]
    %v1059 = vld [vmem:[%s8 + $0x188] sm:$0xff]
    %v1060 = vld [vmem:[%s8 + $0x190] sm:$0xff]
    %v1061 = vld [vmem:[%s8 + $0x198] sm:$0xff]
    %v1062 = vld [vmem:[%s8 + $0x1a0] sm:$0xf]
    %v1063 = vld [vmem:[%s8 + $0x1a4] sm:$0xff]
    %v1064 = vld [vmem:[%s8 + $0x1ac] sm:$0xff]
    %v1065 = vld [vmem:[%s8 + $0x1b4] sm:$0xff]
    %v1066 = vld [vmem:[%s8 + $0x1bc] sm:$0xf]
    %v1067 = vld [vmem:[%s8 + $0x1c0] sm:$0xff]
    %v1068 = vld [vmem:[%s8 + $0x1c8] sm:$0xff]
    %v1069 = vld [vmem:[%s8 + $0x1d0] sm:$0xff]
    %v1070 = vld [vmem:[%s8 + $0x1d8] sm:$0xf]
    %v1071 = vld [vmem:[%s8 + $0x1dc] sm:$0xff]
    %v1072 = vld [vmem:[%s8 + $0x1e4] sm:$0xff]
    %v1073 = vld [vmem:[%s8 + $0x1ec] sm:$0xff]
    %v1074 = vld [vmem:[%s8 + $0x1f4] sm:$0xf]
    %v1075 = vld [vmem:[%s8 + $0x1f8] sm:$0xff]
    %v1076 = vld [vmem:[%s8 + $0x200] sm:$0xff]
    %v1077 = vld [vmem:[%s8 + $0x208] sm:$0xff]
    %v1078 = vld [vmem:[%s8 + $0x210] sm:$0xf]
    %v1079 = vld [vmem:[%s8 + $0x214] sm:$0xff]
    %v1080 = vld [vmem:[%s8 + $0x21c] sm:$0xff]
    %v1081 = vld [vmem:[%s8 + $0x224] sm:$0xff]
    %v1082 = vld [vmem:[%s8 + $0x22c] sm:$0xf]
    %v1083 = vld [vmem:[%s8 + $0x230] sm:$0xff]
    %v1084 = vld [vmem:[%s8 + $0x238] sm:$0xff]
    %v1085 = vld [vmem:[%s8 + $0x240] sm:$0xff]
    %v1086 = vld [vmem:[%s8 + $0x248] sm:$0xf]
    %v1087 = vld [vmem:[%s8 + $0x24c] sm:$0xff]
    %v1088 = vld [vmem:[%s8 + $0x254] sm:$0xff]
    %v1089 = vld [vmem:[%s8 + $0x25c] sm:$0xff]
    %v1090 = vld [vmem:[%s8 + $0x264] sm:$0xf]
    %v1091 = vld [vmem:[%s8 + $0x268] sm:$0xff]
    %v1092 = vld [vmem:[%s8 + $0x270] sm:$0xff]
    %v1093 = vld [vmem:[%s8 + $0x278] sm:$0xff]
    %v1094 = vld [vmem:[%s8 + $0x280] sm:$0xf]
    %v1095 = vld [vmem:[%s8 + $0x284] sm:$0xff]
    %v1096 = vld [vmem:[%s8 + $0x28c] sm:$0xff]
    %v1097 = vld [vmem:[%s8 + $0x294] sm:$0xff]
    %v1098 = vld [vmem:[%s8 + $0x29c] sm:$0xf]
    %v1099 = vld [vmem:[%s8 + $0x2a0] sm:$0xff]
    %v1100 = vld [vmem:[%s8 + $0x2a8] sm:$0xff]
    %v1101 = vld [vmem:[%s8 + $0x2b0] sm:$0xff]
    %v1102 = vld [vmem:[%s8 + $0x2b8] sm:$0xf]
    %v1103 = vld [vmem:[%s8 + $0x2bc] sm:$0xff]
    %v1104 = vld [vmem:[%s8 + $0x2c4] sm:$0xff]
    %v1105 = vld [vmem:[%s8 + $0x2cc] sm:$0xff]
    %v1106 = vld [vmem:[%s8 + $0x2d4] sm:$0xf]
    %v1107 = vld [vmem:[%s8 + $0x2d8] sm:$0xff]
    %v1108 = vld [vmem:[%s8 + $0x2e0] sm:$0xff]
    %v1109 = vld [vmem:[%s8 + $0x2e8] sm:$0xff]
    %v1110 = vld [vmem:[%s8 + $0x2f0] sm:$0xf]
    %v1111 = vld [vmem:[%s8 + $0x2f4] sm:$0xff]
    %v1112 = vld [vmem:[%s8 + $0x2fc] sm:$0xff]
    %v1113 = vld [vmem:[%s8 + $0x304] sm:$0xff]
    %v1114 = vld [vmem:[%s8 + $0x30c] sm:$0xf]
    %v1115 = vld [vmem:[%s8 + $0x310] sm:$0xff]
    %v1116 = vld [vmem:[%s8 + $0x318] sm:$0xff]
    %v1117 = vld [vmem:[%s8 + $0x320] sm:$0xff]
    %v1118 = vld [vmem:[%s8 + $0x328] sm:$0xf]
    %v1119 = vld [vmem:[%s8 + $0x32c] sm:$0xff]
    %v1120 = vld [vmem:[%s8 + $0x334] sm:$0xff]
    %v1121 = vld [vmem:[%s8 + $0x33c] sm:$0xff]
    %v1122 = vld [vmem:[%s8 + $0x344] sm:$0xf]
    %v1123 = vld [vmem:[%s8 + $0x348] sm:$0xff]
    %v1124 = vld [vmem:[%s8 + $0x350] sm:$0xff]
    %v1125 = vld [vmem:[%s8 + $0x358] sm:$0xff]
    %v1126 = vld [vmem:[%s8 + $0x360] sm:$0xf]
    %v1127 = vld [vmem:[%s8 + $0x364] sm:$0xff]
    %v1128 = vld [vmem:[%s8 + $0x36c] sm:$0xff]
    %v1129 = vld [vmem:[%s8 + $0x374] sm:$0xff]
    %v1130 = vld [vmem:[%s8 + $0x37c] sm:$0xf]
    %v1131 = vld [vmem:[%s9] sm:$0x7f]
    %v1133 = vlaneseq
    %v1134 = vshrl.u32 %v1133, 7
    %v1135 = vsub.s32 0, %v1134
    %v1136 = vrot.slane %v1131, %v1135
    %v1137 = vlaneseq
    %v1138 = vshrl.u32 %v1137, 7
    %v1139 = vsub.s32 1, %v1138
    %v1140 = vrot.slane %v1131, %v1139
    %v1141 = vlaneseq
    %v1142 = vshrl.u32 %v1141, 7
    %v1143 = vsub.s32 2, %v1142
    %v1144 = vrot.slane %v1131, %v1143
    %v1145 = vlaneseq
    %v1146 = vshrl.u32 %v1145, 7
    %v1147 = vsub.s32 3, %v1146
    %v1148 = vrot.slane %v1131, %v1147
    %v1149 = vlaneseq
    %v1150 = vshrl.u32 %v1149, 7
    %v1151 = vsub.s32 4, %v1150
    %v1152 = vrot.slane %v1131, %v1151
    %v1153 = vlaneseq
    %v1154 = vshrl.u32 %v1153, 7
    %v1155 = vsub.s32 5, %v1154
    %v1156 = vrot.slane %v1131, %v1155
    %v1157 = vlaneseq
    %v1158 = vshrl.u32 %v1157, 7
    %v1159 = vsub.s32 6, %v1158
    %v1160 = vrot.slane %v1131, %v1159
    %v1296 = vunpack.c.l.b16 %v1003
    %v1297 = vunpack.c.h.b16 %v1003
    %v1298 = vunpack.c.l.b16 %v1004
    %v1299 = vunpack.c.h.b16 %v1004
    %v1300 = vunpack.c.l.b16 %v1005
    %v1301 = vunpack.c.h.b16 %v1005
    %v1302 = vunpack.c.l.b16 %v1006
    %v1303 = vunpack.c.l.b16 %v1007
    %v1304 = vunpack.c.h.b16 %v1007
    %v1305 = vunpack.c.l.b16 %v1008
    %v1306 = vunpack.c.h.b16 %v1008
    %v1307 = vunpack.c.l.b16 %v1009
    %v1308 = vunpack.c.h.b16 %v1009
    %v1309 = vunpack.c.l.b16 %v1010
    %v1310 = vunpack.c.l.b16 %v1011
    %v1311 = vunpack.c.h.b16 %v1011
    %v1312 = vunpack.c.l.b16 %v1012
    %v1313 = vunpack.c.h.b16 %v1012
    %v1314 = vunpack.c.l.b16 %v1013
    %v1315 = vunpack.c.h.b16 %v1013
    %v1316 = vunpack.c.l.b16 %v1014
    %v1317 = vunpack.c.l.b16 %v1015
    %v1318 = vunpack.c.h.b16 %v1015
    %v1319 = vunpack.c.l.b16 %v1016
    %v1320 = vunpack.c.h.b16 %v1016
    %v1321 = vunpack.c.l.b16 %v1017
    %v1322 = vunpack.c.h.b16 %v1017
    %v1323 = vunpack.c.l.b16 %v1018
    %v1324 = vunpack.c.l.b16 %v1019
    %v1325 = vunpack.c.h.b16 %v1019
    %v1326 = vunpack.c.l.b16 %v1020
    %v1327 = vunpack.c.h.b16 %v1020
    %v1328 = vunpack.c.l.b16 %v1021
    %v1329 = vunpack.c.h.b16 %v1021
    %v1330 = vunpack.c.l.b16 %v1022
    %v1331 = vunpack.c.l.b16 %v1023
    %v1332 = vunpack.c.h.b16 %v1023
    %v1333 = vunpack.c.l.b16 %v1024
    %v1334 = vunpack.c.h.b16 %v1024
    %v1335 = vunpack.c.l.b16 %v1025
    %v1336 = vunpack.c.h.b16 %v1025
    %v1337 = vunpack.c.l.b16 %v1026
    %v1338 = vunpack.c.l.b16 %v1027
    %v1339 = vunpack.c.h.b16 %v1027
    %v1340 = vunpack.c.l.b16 %v1028
    %v1341 = vunpack.c.h.b16 %v1028
    %v1342 = vunpack.c.l.b16 %v1029
    %v1343 = vunpack.c.h.b16 %v1029
    %v1344 = vunpack.c.l.b16 %v1030
    %v1345 = vunpack.c.l.b16 %v1031
    %v1346 = vunpack.c.h.b16 %v1031
    %v1347 = vunpack.c.l.b16 %v1032
    %v1348 = vunpack.c.h.b16 %v1032
    %v1349 = vunpack.c.l.b16 %v1033
    %v1350 = vunpack.c.h.b16 %v1033
    %v1351 = vunpack.c.l.b16 %v1034
    %v1352 = vunpack.c.l.b16 %v1035
    %v1353 = vunpack.c.h.b16 %v1035
    %v1354 = vunpack.c.l.b16 %v1036
    %v1355 = vunpack.c.h.b16 %v1036
    %v1356 = vunpack.c.l.b16 %v1037
    %v1357 = vunpack.c.h.b16 %v1037
    %v1358 = vunpack.c.l.b16 %v1038
    %v1359 = vunpack.c.l.b16 %v1039
    %v1360 = vunpack.c.h.b16 %v1039
    %v1361 = vunpack.c.l.b16 %v1040
    %v1362 = vunpack.c.h.b16 %v1040
    %v1363 = vunpack.c.l.b16 %v1041
    %v1364 = vunpack.c.h.b16 %v1041
    %v1365 = vunpack.c.l.b16 %v1042
    %v1366 = vunpack.c.l.b16 %v1043
    %v1367 = vunpack.c.h.b16 %v1043
    %v1368 = vunpack.c.l.b16 %v1044
    %v1369 = vunpack.c.h.b16 %v1044
    %v1370 = vunpack.c.l.b16 %v1045
    %v1371 = vunpack.c.h.b16 %v1045
    %v1372 = vunpack.c.l.b16 %v1046
    %v1373 = vunpack.c.l.b16 %v1047
    %v1374 = vunpack.c.h.b16 %v1047
    %v1375 = vunpack.c.l.b16 %v1048
    %v1376 = vunpack.c.h.b16 %v1048
    %v1377 = vunpack.c.l.b16 %v1049
    %v1378 = vunpack.c.h.b16 %v1049
    %v1379 = vunpack.c.l.b16 %v1050
    %v1380 = vunpack.c.l.b16 %v1051
    %v1381 = vunpack.c.h.b16 %v1051
    %v1382 = vunpack.c.l.b16 %v1052
    %v1383 = vunpack.c.h.b16 %v1052
    %v1384 = vunpack.c.l.b16 %v1053
    %v1385 = vunpack.c.h.b16 %v1053
    %v1386 = vunpack.c.l.b16 %v1054
    %v1387 = vunpack.c.l.b16 %v1055
    %v1388 = vunpack.c.h.b16 %v1055
    %v1389 = vunpack.c.l.b16 %v1056
    %v1390 = vunpack.c.h.b16 %v1056
    %v1391 = vunpack.c.l.b16 %v1057
    %v1392 = vunpack.c.h.b16 %v1057
    %v1393 = vunpack.c.l.b16 %v1058
    %v1394 = vunpack.c.l.b16 %v1059
    %v1395 = vunpack.c.h.b16 %v1059
    %v1396 = vunpack.c.l.b16 %v1060
    %v1397 = vunpack.c.h.b16 %v1060
    %v1398 = vunpack.c.l.b16 %v1061
    %v1399 = vunpack.c.h.b16 %v1061
    %v1400 = vunpack.c.l.b16 %v1062
    %v1401 = vunpack.c.l.b16 %v1063
    %v1402 = vunpack.c.h.b16 %v1063
    %v1403 = vunpack.c.l.b16 %v1064
    %v1404 = vunpack.c.h.b16 %v1064
    %v1405 = vunpack.c.l.b16 %v1065
    %v1406 = vunpack.c.h.b16 %v1065
    %v1407 = vunpack.c.l.b16 %v1066
    %v1408 = vunpack.c.l.b16 %v1067
    %v1409 = vunpack.c.h.b16 %v1067
    %v1410 = vunpack.c.l.b16 %v1068
    %v1411 = vunpack.c.h.b16 %v1068
    %v1412 = vunpack.c.l.b16 %v1069
    %v1413 = vunpack.c.h.b16 %v1069
    %v1414 = vunpack.c.l.b16 %v1070
    %v1415 = vunpack.c.l.b16 %v1071
    %v1416 = vunpack.c.h.b16 %v1071
    %v1417 = vunpack.c.l.b16 %v1072
    %v1418 = vunpack.c.h.b16 %v1072
    %v1419 = vunpack.c.l.b16 %v1073
    %v1420 = vunpack.c.h.b16 %v1073
    %v1421 = vunpack.c.l.b16 %v1074
    %v1422 = vunpack.c.l.b16 %v1075
    %v1423 = vunpack.c.h.b16 %v1075
    %v1424 = vunpack.c.l.b16 %v1076
    %v1425 = vunpack.c.h.b16 %v1076
    %v1426 = vunpack.c.l.b16 %v1077
    %v1427 = vunpack.c.h.b16 %v1077
    %v1428 = vunpack.c.l.b16 %v1078
    %v1429 = vunpack.c.l.b16 %v1079
    %v1430 = vunpack.c.h.b16 %v1079
    %v1431 = vunpack.c.l.b16 %v1080
    %v1432 = vunpack.c.h.b16 %v1080
    %v1433 = vunpack.c.l.b16 %v1081
    %v1434 = vunpack.c.h.b16 %v1081
    %v1435 = vunpack.c.l.b16 %v1082
    %v1436 = vunpack.c.l.b16 %v1083
    %v1437 = vunpack.c.h.b16 %v1083
    %v1438 = vunpack.c.l.b16 %v1084
    %v1439 = vunpack.c.h.b16 %v1084
    %v1440 = vunpack.c.l.b16 %v1085
    %v1441 = vunpack.c.h.b16 %v1085
    %v1442 = vunpack.c.l.b16 %v1086
    %v1443 = vunpack.c.l.b16 %v1087
    %v1444 = vunpack.c.h.b16 %v1087
    %v1445 = vunpack.c.l.b16 %v1088
    %v1446 = vunpack.c.h.b16 %v1088
    %v1447 = vunpack.c.l.b16 %v1089
    %v1448 = vunpack.c.h.b16 %v1089
    %v1449 = vunpack.c.l.b16 %v1090
    %v1450 = vunpack.c.l.b16 %v1091
    %v1451 = vunpack.c.h.b16 %v1091
    %v1452 = vunpack.c.l.b16 %v1092
    %v1453 = vunpack.c.h.b16 %v1092
    %v1454 = vunpack.c.l.b16 %v1093
    %v1455 = vunpack.c.h.b16 %v1093
    %v1456 = vunpack.c.l.b16 %v1094
    %v1457 = vunpack.c.l.b16 %v1095
    %v1458 = vunpack.c.h.b16 %v1095
    %v1459 = vunpack.c.l.b16 %v1096
    %v1460 = vunpack.c.h.b16 %v1096
    %v1461 = vunpack.c.l.b16 %v1097
    %v1462 = vunpack.c.h.b16 %v1097
    %v1463 = vunpack.c.l.b16 %v1098
    %v1464 = vunpack.c.l.b16 %v1099
    %v1465 = vunpack.c.h.b16 %v1099
    %v1466 = vunpack.c.l.b16 %v1100
    %v1467 = vunpack.c.h.b16 %v1100
    %v1468 = vunpack.c.l.b16 %v1101
    %v1469 = vunpack.c.h.b16 %v1101
    %v1470 = vunpack.c.l.b16 %v1102
    %v1471 = vunpack.c.l.b16 %v1103
    %v1472 = vunpack.c.h.b16 %v1103
    %v1473 = vunpack.c.l.b16 %v1104
    %v1474 = vunpack.c.h.b16 %v1104
    %v1475 = vunpack.c.l.b16 %v1105
    %v1476 = vunpack.c.h.b16 %v1105
    %v1477 = vunpack.c.l.b16 %v1106
    %v1478 = vunpack.c.l.b16 %v1107
    %v1479 = vunpack.c.h.b16 %v1107
    %v1480 = vunpack.c.l.b16 %v1108
    %v1481 = vunpack.c.h.b16 %v1108
    %v1482 = vunpack.c.l.b16 %v1109
    %v1483 = vunpack.c.h.b16 %v1109
    %v1484 = vunpack.c.l.b16 %v1110
    %v1485 = vunpack.c.l.b16 %v1111
    %v1486 = vunpack.c.h.b16 %v1111
    %v1487 = vunpack.c.l.b16 %v1112
    %v1488 = vunpack.c.h.b16 %v1112
    %v1489 = vunpack.c.l.b16 %v1113
    %v1490 = vunpack.c.h.b16 %v1113
    %v1491 = vunpack.c.l.b16 %v1114
    %v1492 = vunpack.c.l.b16 %v1115
    %v1493 = vunpack.c.h.b16 %v1115
    %v1494 = vunpack.c.l.b16 %v1116
    %v1495 = vunpack.c.h.b16 %v1116
    %v1496 = vunpack.c.l.b16 %v1117
    %v1497 = vunpack.c.h.b16 %v1117
    %v1498 = vunpack.c.l.b16 %v1118
    %v1499 = vunpack.c.l.b16 %v1119
    %v1500 = vunpack.c.h.b16 %v1119
    %v1501 = vunpack.c.l.b16 %v1120
    %v1502 = vunpack.c.h.b16 %v1120
    %v1503 = vunpack.c.l.b16 %v1121
    %v1504 = vunpack.c.h.b16 %v1121
    %v1505 = vunpack.c.l.b16 %v1122
    %v1506 = vunpack.c.l.b16 %v1123
    %v1507 = vunpack.c.h.b16 %v1123
    %v1508 = vunpack.c.l.b16 %v1124
    %v1509 = vunpack.c.h.b16 %v1124
    %v1510 = vunpack.c.l.b16 %v1125
    %v1511 = vunpack.c.h.b16 %v1125
    %v1512 = vunpack.c.l.b16 %v1126
    %v1513 = vunpack.c.l.b16 %v1127
    %v1514 = vunpack.c.h.b16 %v1127
    %v1515 = vunpack.c.l.b16 %v1128
    %v1516 = vunpack.c.h.b16 %v1128
    %v1517 = vunpack.c.l.b16 %v1129
    %v1518 = vunpack.c.h.b16 %v1129
    %v1519 = vunpack.c.l.b16 %v1130
    %v1520 = vpack.c.b16 %v1303, %v1296
    %v1521 = vpack.c.b16 %v1304, %v1297
    %v1522 = vpack.c.b16 %v1305, %v1298
    %v1523 = vpack.c.b16 %v1306, %v1299
    %v1524 = vpack.c.b16 %v1307, %v1300
    %v1525 = vpack.c.b16 %v1308, %v1301
    %v1526 = vpack.c.b16 %v1309, %v1302
    %v1527 = vpack.c.b16 %v1317, %v1310
    %v1528 = vpack.c.b16 %v1318, %v1311
    %v1529 = vpack.c.b16 %v1319, %v1312
    %v1530 = vpack.c.b16 %v1320, %v1313
    %v1531 = vpack.c.b16 %v1321, %v1314
    %v1532 = vpack.c.b16 %v1322, %v1315
    %v1533 = vpack.c.b16 %v1323, %v1316
    %v1534 = vpack.c.b16 %v1331, %v1324
    %v1535 = vpack.c.b16 %v1332, %v1325
    %v1536 = vpack.c.b16 %v1333, %v1326
    %v1537 = vpack.c.b16 %v1334, %v1327
    %v1538 = vpack.c.b16 %v1335, %v1328
    %v1539 = vpack.c.b16 %v1336, %v1329
    %v1540 = vpack.c.b16 %v1337, %v1330
    %v1541 = vpack.c.b16 %v1345, %v1338
    %v1542 = vpack.c.b16 %v1346, %v1339
    %v1543 = vpack.c.b16 %v1347, %v1340
    %v1544 = vpack.c.b16 %v1348, %v1341
    %v1545 = vpack.c.b16 %v1349, %v1342
    %v1546 = vpack.c.b16 %v1350, %v1343
    %v1547 = vpack.c.b16 %v1351, %v1344
    %v1548 = vpack.c.b16 %v1359, %v1352
    %v1549 = vpack.c.b16 %v1360, %v1353
    %v1550 = vpack.c.b16 %v1361, %v1354
    %v1551 = vpack.c.b16 %v1362, %v1355
    %v1552 = vpack.c.b16 %v1363, %v1356
    %v1553 = vpack.c.b16 %v1364, %v1357
    %v1554 = vpack.c.b16 %v1365, %v1358
    %v1555 = vpack.c.b16 %v1373, %v1366
    %v1556 = vpack.c.b16 %v1374, %v1367
    %v1557 = vpack.c.b16 %v1375, %v1368
    %v1558 = vpack.c.b16 %v1376, %v1369
    %v1559 = vpack.c.b16 %v1377, %v1370
    %v1560 = vpack.c.b16 %v1378, %v1371
    %v1561 = vpack.c.b16 %v1379, %v1372
    %v1562 = vpack.c.b16 %v1387, %v1380
    %v1563 = vpack.c.b16 %v1388, %v1381
    %v1564 = vpack.c.b16 %v1389, %v1382
    %v1565 = vpack.c.b16 %v1390, %v1383
    %v1566 = vpack.c.b16 %v1391, %v1384
    %v1567 = vpack.c.b16 %v1392, %v1385
    %v1568 = vpack.c.b16 %v1393, %v1386
    %v1569 = vpack.c.b16 %v1401, %v1394
    %v1570 = vpack.c.b16 %v1402, %v1395
    %v1571 = vpack.c.b16 %v1403, %v1396
    %v1572 = vpack.c.b16 %v1404, %v1397
    %v1573 = vpack.c.b16 %v1405, %v1398
    %v1574 = vpack.c.b16 %v1406, %v1399
    %v1575 = vpack.c.b16 %v1407, %v1400
    %v1576 = vpack.c.b16 %v1415, %v1408
    %v1577 = vpack.c.b16 %v1416, %v1409
    %v1578 = vpack.c.b16 %v1417, %v1410
    %v1579 = vpack.c.b16 %v1418, %v1411
    %v1580 = vpack.c.b16 %v1419, %v1412
    %v1581 = vpack.c.b16 %v1420, %v1413
    %v1582 = vpack.c.b16 %v1421, %v1414
    %v1583 = vpack.c.b16 %v1429, %v1422
    %v1584 = vpack.c.b16 %v1430, %v1423
    %v1585 = vpack.c.b16 %v1431, %v1424
    %v1586 = vpack.c.b16 %v1432, %v1425
    %v1587 = vpack.c.b16 %v1433, %v1426
    %v1588 = vpack.c.b16 %v1434, %v1427
    %v1589 = vpack.c.b16 %v1435, %v1428
    %v1590 = vpack.c.b16 %v1443, %v1436
    %v1591 = vpack.c.b16 %v1444, %v1437
    %v1592 = vpack.c.b16 %v1445, %v1438
    %v1593 = vpack.c.b16 %v1446, %v1439
    %v1594 = vpack.c.b16 %v1447, %v1440
    %v1595 = vpack.c.b16 %v1448, %v1441
    %v1596 = vpack.c.b16 %v1449, %v1442
    %v1597 = vpack.c.b16 %v1457, %v1450
    %v1598 = vpack.c.b16 %v1458, %v1451
    %v1599 = vpack.c.b16 %v1459, %v1452
    %v1600 = vpack.c.b16 %v1460, %v1453
    %v1601 = vpack.c.b16 %v1461, %v1454
    %v1602 = vpack.c.b16 %v1462, %v1455
    %v1603 = vpack.c.b16 %v1463, %v1456
    %v1604 = vpack.c.b16 %v1471, %v1464
    %v1605 = vpack.c.b16 %v1472, %v1465
    %v1606 = vpack.c.b16 %v1473, %v1466
    %v1607 = vpack.c.b16 %v1474, %v1467
    %v1608 = vpack.c.b16 %v1475, %v1468
    %v1609 = vpack.c.b16 %v1476, %v1469
    %v1610 = vpack.c.b16 %v1477, %v1470
    %v1611 = vpack.c.b16 %v1485, %v1478
    %v1612 = vpack.c.b16 %v1486, %v1479
    %v1613 = vpack.c.b16 %v1487, %v1480
    %v1614 = vpack.c.b16 %v1488, %v1481
    %v1615 = vpack.c.b16 %v1489, %v1482
    %v1616 = vpack.c.b16 %v1490, %v1483
    %v1617 = vpack.c.b16 %v1491, %v1484
    %v1618 = vpack.c.b16 %v1499, %v1492
    %v1619 = vpack.c.b16 %v1500, %v1493
    %v1620 = vpack.c.b16 %v1501, %v1494
    %v1621 = vpack.c.b16 %v1502, %v1495
    %v1622 = vpack.c.b16 %v1503, %v1496
    %v1623 = vpack.c.b16 %v1504, %v1497
    %v1624 = vpack.c.b16 %v1505, %v1498
    %v1625 = vpack.c.b16 %v1513, %v1506
    %v1626 = vpack.c.b16 %v1514, %v1507
    %v1627 = vpack.c.b16 %v1515, %v1508
    %v1628 = vpack.c.b16 %v1516, %v1509
    %v1629 = vpack.c.b16 %v1517, %v1510
    %v1630 = vpack.c.b16 %v1518, %v1511
    %v1631 = vpack.c.b16 %v1519, %v1512
    %1744 = vmatprep.subr.bf16.mxu0 %v1570
    %1745 = vmatpush1.bf16.msra.mxu0 %v1569
    %1746 = vmatprep.subr.bf16.mxu0 %v1563
    %1747 = vmatpush1.bf16.msra.mxu0 %v1562
    %1748 = vmatprep.subr.bf16.mxu0 %v1556
    %1749 = vmatpush1.bf16.msra.mxu0 %v1555
    %1750 = vmatprep.subr.bf16.mxu0 %v1549
    %1751 = vmatpush1.bf16.msra.mxu0 %v1548
    %1752 = vmatprep.subr.bf16.mxu0 %v1542
    %1753 = vmatpush1.bf16.msra.mxu0 %v1541
    %1754 = vmatprep.subr.bf16.mxu0 %v1535
    %1755 = vmatpush1.bf16.msra.mxu0 %v1534
    %1756 = vmatprep.subr.bf16.mxu0 %v1528
    %1757 = vmatpush1.bf16.msra.mxu0 %v1527
    %1758 = vmatprep.subr.bf16.mxu0 %v1521
    %1759 = vmatpush1.bf16.msra.mxu0 %v1520
    %1760 = vmatprep.subr.bf16.mxu0 %v1626
    %1761 = vmatpush2.bf16.msra.mxu0 %v1625
    %1762 = vmatprep.subr.bf16.mxu0 %v1619
    %1763 = vmatpush2.bf16.msra.mxu0 %v1618
    %1764 = vmatprep.subr.bf16.mxu0 %v1612
    %1765 = vmatpush2.bf16.msra.mxu0 %v1611
    %1766 = vmatprep.subr.bf16.mxu0 %v1605
    %1767 = vmatpush2.bf16.msra.mxu0 %v1604
    %1768 = vmatprep.subr.bf16.mxu0 %v1598
    %1769 = vmatpush2.bf16.msra.mxu0 %v1597
    %1770 = vmatprep.subr.bf16.mxu0 %v1591
    %1771 = vmatpush2.bf16.msra.mxu0 %v1590
    %1772 = vmatprep.subr.bf16.mxu0 %v1584
    %1773 = vmatpush2.bf16.msra.mxu0 %v1583
    %1774 = vmatprep.subr.bf16.mxu0 %v1577
    %1775 = vmatpush2.bf16.msra.mxu0 %v1576
    %1776 = vmatprep.mubr.bf16.mxu0 %v1002
    %1777 = vmatmul.mubr.bf16.gmra.mxu0 %v1001
    %v1778 = vpop.f32.mrf.mxu0
    %v1779 = vadd.f32 %v1136, %v1778
    %v1780 = vpop.f32.mrf.mxu0
    %v1781 = vadd.f32 %v1140, %v1780
    %v1782 = vpop.f32.mrf.mxu0
    %v1783 = vpop.f32.mrf.mxu0
    %1784 = vdwg.mxu0
    %1785 = vmatprep.subr.bf16.mxu0 %v1572
    %1786 = vmatpush1.bf16.msra.mxu0 %v1571
    %1787 = vmatprep.subr.bf16.mxu0 %v1565
    %1788 = vmatpush1.bf16.msra.mxu0 %v1564
    %1789 = vmatprep.subr.bf16.mxu0 %v1558
    %1790 = vmatpush1.bf16.msra.mxu0 %v1557
    %1791 = vmatprep.subr.bf16.mxu0 %v1551
    %1792 = vmatpush1.bf16.msra.mxu0 %v1550
    %1793 = vmatprep.subr.bf16.mxu0 %v1544
    %1794 = vmatpush1.bf16.msra.mxu0 %v1543
    %1795 = vmatprep.subr.bf16.mxu0 %v1537
    %1796 = vmatpush1.bf16.msra.mxu0 %v1536
    %1797 = vmatprep.subr.bf16.mxu0 %v1530
    %1798 = vmatpush1.bf16.msra.mxu0 %v1529
    %1799 = vmatprep.subr.bf16.mxu0 %v1523
    %1800 = vmatpush1.bf16.msra.mxu0 %v1522
    %1801 = vmatprep.subr.bf16.mxu0 %v1628
    %1802 = vmatpush2.bf16.msra.mxu0 %v1627
    %1803 = vmatprep.subr.bf16.mxu0 %v1621
    %1804 = vmatpush2.bf16.msra.mxu0 %v1620
    %1805 = vmatprep.subr.bf16.mxu0 %v1614
    %1806 = vmatpush2.bf16.msra.mxu0 %v1613
    %1807 = vmatprep.subr.bf16.mxu0 %v1607
    %1808 = vmatpush2.bf16.msra.mxu0 %v1606
    %1809 = vmatprep.subr.bf16.mxu0 %v1600
    %1810 = vmatpush2.bf16.msra.mxu0 %v1599
    %1811 = vmatprep.subr.bf16.mxu0 %v1593
    %1812 = vmatpush2.bf16.msra.mxu0 %v1592
    %1813 = vmatprep.subr.bf16.mxu0 %v1586
    %1814 = vmatpush2.bf16.msra.mxu0 %v1585
    %1815 = vmatprep.subr.bf16.mxu0 %v1579
    %1816 = vmatpush2.bf16.msra.mxu0 %v1578
    %1817 = vmatprep.mubr.bf16.mxu0 %v1002
    %1818 = vmatmul.mubr.bf16.gmra.mxu0 %v1001
    %v1819 = vpop.f32.mrf.mxu0
    %v1820 = vadd.f32 %v1144, %v1819
    %v1821 = vpop.f32.mrf.mxu0
    %v1822 = vadd.f32 %v1148, %v1821
    %v1823 = vpop.f32.mrf.mxu0
    %v1824 = vpop.f32.mrf.mxu0
    %1825 = vdwg.mxu0
    %1826 = vmatprep.subr.bf16.mxu0 %v1574
    %1827 = vmatpush1.bf16.msra.mxu0 %v1573
    %1828 = vmatprep.subr.bf16.mxu0 %v1567
    %1829 = vmatpush1.bf16.msra.mxu0 %v1566
    %1830 = vmatprep.subr.bf16.mxu0 %v1560
    %1831 = vmatpush1.bf16.msra.mxu0 %v1559
    %1832 = vmatprep.subr.bf16.mxu0 %v1553
    %1833 = vmatpush1.bf16.msra.mxu0 %v1552
    %1834 = vmatprep.subr.bf16.mxu0 %v1546
    %1835 = vmatpush1.bf16.msra.mxu0 %v1545
    %1836 = vmatprep.subr.bf16.mxu0 %v1539
    %1837 = vmatpush1.bf16.msra.mxu0 %v1538
    %1838 = vmatprep.subr.bf16.mxu0 %v1532
    %1839 = vmatpush1.bf16.msra.mxu0 %v1531
    %1840 = vmatprep.subr.bf16.mxu0 %v1525
    %1841 = vmatpush1.bf16.msra.mxu0 %v1524
    %1842 = vmatprep.subr.bf16.mxu0 %v1630
    %1843 = vmatpush2.bf16.msra.mxu0 %v1629
    %1844 = vmatprep.subr.bf16.mxu0 %v1623
    %1845 = vmatpush2.bf16.msra.mxu0 %v1622
    %1846 = vmatprep.subr.bf16.mxu0 %v1616
    %1847 = vmatpush2.bf16.msra.mxu0 %v1615
    %1848 = vmatprep.subr.bf16.mxu0 %v1609
    %1849 = vmatpush2.bf16.msra.mxu0 %v1608
    %1850 = vmatprep.subr.bf16.mxu0 %v1602
    %1851 = vmatpush2.bf16.msra.mxu0 %v1601
    %1852 = vmatprep.subr.bf16.mxu0 %v1595
    %1853 = vmatpush2.bf16.msra.mxu0 %v1594
    %1854 = vmatprep.subr.bf16.mxu0 %v1588
    %1855 = vmatpush2.bf16.msra.mxu0 %v1587
    %1856 = vmatprep.subr.bf16.mxu0 %v1581
    %1857 = vmatpush2.bf16.msra.mxu0 %v1580
    %1858 = vmatprep.mubr.bf16.mxu0 %v1002
    %1859 = vmatmul.mubr.bf16.gmra.mxu0 %v1001
    %v1860 = vpop.f32.mrf.mxu0
    %v1861 = vadd.f32 %v1152, %v1860
    %v1862 = vpop.f32.mrf.mxu0
    %v1863 = vadd.f32 %v1156, %v1862
    %v1864 = vpop.f32.mrf.mxu0
    %v1865 = vpop.f32.mrf.mxu0
    %1866 = vdwg.mxu0
    %1867 = vmatprep.subr.bf16.mxu0 0
    %1868 = vmatpush1.bf16.msra.mxu0 %v1575
    %1869 = vmatprep.subr.bf16.mxu0 0
    %1870 = vmatpush1.bf16.msra.mxu0 %v1568
    %1871 = vmatprep.subr.bf16.mxu0 0
    %1872 = vmatpush1.bf16.msra.mxu0 %v1561
    %1873 = vmatprep.subr.bf16.mxu0 0
    %1874 = vmatpush1.bf16.msra.mxu0 %v1554
    %1875 = vmatprep.subr.bf16.mxu0 0
    %1876 = vmatpush1.bf16.msra.mxu0 %v1547
    %1877 = vmatprep.subr.bf16.mxu0 0
    %1878 = vmatpush1.bf16.msra.mxu0 %v1540
    %1879 = vmatprep.subr.bf16.mxu0 0
    %1880 = vmatpush1.bf16.msra.mxu0 %v1533
    %1881 = vmatprep.subr.bf16.mxu0 0
    %1882 = vmatpush1.bf16.msra.mxu0 %v1526
    %1883 = vmatprep.subr.bf16.mxu0 0
    %1884 = vmatpush2.bf16.msra.mxu0 %v1631
    %1885 = vmatprep.subr.bf16.mxu0 0
    %1886 = vmatpush2.bf16.msra.mxu0 %v1624
    %1887 = vmatprep.subr.bf16.mxu0 0
    %1888 = vmatpush2.bf16.msra.mxu0 %v1617
    %1889 = vmatprep.subr.bf16.mxu0 0
    %1890 = vmatpush2.bf16.msra.mxu0 %v1610
    %1891 = vmatprep.subr.bf16.mxu0 0
    %1892 = vmatpush2.bf16.msra.mxu0 %v1603
    %1893 = vmatprep.subr.bf16.mxu0 0
    %1894 = vmatpush2.bf16.msra.mxu0 %v1596
    %1895 = vmatprep.subr.bf16.mxu0 0
    %1896 = vmatpush2.bf16.msra.mxu0 %v1589
    %1897 = vmatprep.subr.bf16.mxu0 0
    %1898 = vmatpush2.bf16.msra.mxu0 %v1582
    %1899 = vmatprep.mubr.bf16.mxu0 %v1002
    %1900 = vmatmul.mubr.bf16.gmra.mxu0 %v1001
    %v1901 = vpop.f32.mrf.mxu0
    %v1902 = vadd.f32 %v1160, %v1901
    %v1903 = vpop.f32.mrf.mxu0
    %v1904 = vpop.f32.mrf.mxu0
    %v1905 = vpop.f32.mrf.mxu0
    %1906 = vdwg.mxu0
    %v1907 = vxor.u32 %v1779, 2147483648
    %v1908 = vxor.u32 %v1781, 2147483648
    %v1909 = vxor.u32 %v1820, 2147483648
    %v1910 = vxor.u32 %v1822, 2147483648
    %v1911 = vxor.u32 %v1861, 2147483648
    %v1912 = vxor.u32 %v1863, 2147483648
    %v1913 = vxor.u32 %v1902, 2147483648
    %v1914 = vmul.f32 %v1907, 1.442695
    %v1915 = vpow.pop %v1914
    %v1916 = vmul.f32 %v1908, 1.442695
    %v1917 = vpow.pop %v1916
    %v1918 = vmul.f32 %v1909, 1.442695
    %v1919 = vpow.pop %v1918
    %v1920 = vmul.f32 %v1910, 1.442695
    %v1921 = vpow.pop %v1920
    %v1922 = vmul.f32 %v1911, 1.442695
    %v1923 = vpow.pop %v1922
    %v1924 = vmul.f32 %v1912, 1.442695
    %v1925 = vpow.pop %v1924
    %v1926 = vmul.f32 %v1913, 1.442695
    %v1927 = vpow.pop %v1926
    %v1928 = vadd.f32 %v1915, 1.0
    %v1929 = vadd.f32 %v1917, 1.0
    %v1930 = vadd.f32 %v1919, 1.0
    %v1931 = vadd.f32 %v1921, 1.0
    %v1932 = vadd.f32 %v1923, 1.0
    %v1933 = vadd.f32 %v1925, 1.0
    %v1934 = vadd.f32 %v1927, 1.0
    %v1935 = vrcp.pop %v1928
    %v1936 = vmul.f32 1.0, %v1935
    %v1937 = vrcp.pop %v1929
    %v1938 = vmul.f32 1.0, %v1937
    %v1939 = vrcp.pop %v1930
    %v1940 = vmul.f32 1.0, %v1939
    %v1941 = vrcp.pop %v1931
    %v1942 = vmul.f32 1.0, %v1941
    %v1943 = vrcp.pop %v1932
    %v1944 = vmul.f32 1.0, %v1943
    %v1945 = vrcp.pop %v1933
    %v1946 = vmul.f32 1.0, %v1945
    %v1947 = vrcp.pop %v1934
    %v1948 = vmul.f32 1.0, %v1947
    %v1949 = vpack.c.bf16 %v1936, %v1936
    %v1950 = vpack.c.bf16 %v1938, %v1938
    %v1951 = vpack.c.bf16 %v1940, %v1940
    %v1952 = vpack.c.bf16 %v1942, %v1942
    %v1953 = vpack.c.bf16 %v1944, %v1944
    %v1954 = vpack.c.bf16 %v1946, %v1946
    %v1955 = vpack.c.bf16 %v1948, %v1948
    %v1963 = vunpack.c.l.b16 %v1949
    %v1964 = vunpack.c.l.b16 %v1950
    %v1965 = vunpack.c.l.b16 %v1951
    %v1966 = vunpack.c.l.b16 %v1952
    %v1967 = vunpack.c.l.b16 %v1953
    %v1968 = vunpack.c.l.b16 %v1954
    %v1969 = vunpack.c.l.b16 %v1955
    %v1970 = vpack.c.b16 %v1964, %v1963
    %v1971 = vpack.c.b16 %v1966, %v1965
    %v1972 = vpack.c.b16 %v1968, %v1967
    %v1973 = vpack.c.b16 %v1969, %v1969
    %1978 = vst [vmem:[#allocation2] sm:$0xff] %v1970
    %1979 = vst [vmem:[#allocation2 + $0x8] sm:$0xff] %v1971
    %1980 = vst [vmem:[#allocation2 + $0x10] sm:$0xff] %v1972
    %vm1981 = vcmask 125952
    %1982 = vst.msk [vmem:[#allocation2 + $0x18] sm:$0xf] %vm1981, %v1973
    // Predicated region
    $region42: #{tpu_custom_call.1} parent=1 // pred_check
      _
    $region43: #{tpu_custom_call.1} parent=1 // pred_check_branch
      %1984 = sbr.rel (0) target = $region45
    $region44: #{tpu_custom_call.1} parent=1 // pred_region
      %s1986 = ssub.s32 448, 448
      %1987 = vsyncadd [#allocation3], %s1986
      %s1989 = sshll.u32 [#allocation2], 4
      %s1990 = int_to_ptr.vmem [resolvable:$true] %s1989
      %1992 = dma.vmem_to_hbm [thread:$0]  %s1990, 448, %s10, [#allocation3]
    $region45: #{tpu_custom_call.1} parent=1 // pred_fallthru
      _
    // Predicated region
    $region46: #{tpu_custom_call.1} parent=1 // pred_check
      _
    $region47: #{tpu_custom_call.1} parent=1 // pred_check_branch
      %1994 = sbr.rel (0) target = $region49
    $region48: #{tpu_custom_call.1} parent=1 // pred_region
      %s1996 = ssub.s32 128, 128
      %1997 = vsyncadd [#allocation5], %s1996
      %s1999 = sshll.u32 [#allocation4], 4
      %s2000 = int_to_ptr.vmem [resolvable:$true] %s1999
      %2002 = dma.vmem_to_hbm [thread:$0]  %s2000, 128, %s11, [#allocation5]
    $region49: #{tpu_custom_call.1} parent=1 // pred_fallthru
      _
    // Predicated region
    $region50: #{tpu_custom_call.1} parent=1 // pred_check
      _
    $region51: #{tpu_custom_call.1} parent=1 // pred_check_branch
      %2004 = sbr.rel (0) target = $region53
    $region52: #{tpu_custom_call.1} parent=1 // pred_region
      %2005 = dma.done [#allocation3], 448
    $region53: #{tpu_custom_call.1} parent=1 // pred_fallthru
      _
    // Predicated region
    $region54: #{tpu_custom_call.1} parent=1 // pred_check
      _
    $region55: #{tpu_custom_call.1} parent=1 // pred_check_branch
      %2007 = sbr.rel (0) target = $region57
    $region56: #{tpu_custom_call.1} parent=1 // pred_region
      %2008 = dma.done [#allocation5], 128
    $region57: #{tpu_custom_call.1} parent=1 // pred_fallthru
      _
    %2009 = vsyncpa [#allocation3], 1
    %2010 = vsyncpa [#allocation5], 1

</llo_original>
